<compile_context>
chip_gen: v7x
topology: tpu7x:2x2x1
jax: 0.10.0
libtpu: 0.0.40
codegen_flags: <defaults>
</compile_context>

<pallas_src>
import math

import jax
import jax.numpy as jnp
from jax import lax
from jax.experimental import pallas as pl
from jax.experimental.pallas import tpu as pltpu

# ---------------------------------------------------------------- config
H = W = 16            # input spatial size
P = 4                 # patch size
HP, WP = H // P, W // P
NP = HP * WP          # number of image tokens (16)
PD = P * P * 3        # raw patch dim (48)
PDP = 128             # patch dim zero-padded to a full lane tile
D = 128               # embed dim (lane-dense)
DH = 256              # mlp hidden dim
NPTS = 2              # number of prompt points
NTOK = 8              # padded decoder token rows (mask, iou, NPTS pts, zero pad)

# activation slab row layout: [patches(0:16), toks(16:24), pos(24:40), vecs(40:48)]
A_PATCH, A_TOK, A_POS, A_VEC = 0, NP, NP + NTOK, NP + NTOK + NP
A_ROWS = A_VEC + 8


# ---------------------------------------------------------------- kernel
def mini_sam_kernel(
    acts_ref,    # (48, 128)  f32   [patches | decoder tokens | pos | vecs]
    w128_ref,    # (640, 128) bf16  [w_patch | wo1 | w_up2 | w_mlp2]
    w384_ref,    # (2, 128, 384) bf16  [0]=[wq|wk|wv]  [1]=[wk2|wv2|w_up1]
    w256_ref,    # (3, 128, 256) bf16  [0]=w_mlp1 [1]=[wq2|w_hyper] [2]=[wo2|wo2@w_hyper]
    out_ref,     # (8, 128)   f32   ONLY out[0,:NP] (mask logits) and out[1,0] (IoU)
                 #                  are defined; the rest is uninitialized.
):
    f32, bf16 = jnp.float32, jnp.bfloat16

    def mm(a, b):                                  # (M,K) @ (K,N), bf16 MXU path
        return jnp.dot(a.astype(bf16), b.astype(bf16), preferred_element_type=f32)

    def mm_nt(a, b):                               # (M,K) @ (N,K)^T, bf16 MXU path
        return lax.dot_general(a.astype(bf16), b.astype(bf16),
                               (((1,), (1,)), ((), ())),
                               preferred_element_type=f32)

    def layernorm(x, g, b):                        # f32 VPU math
        mu = jnp.mean(x, axis=-1, keepdims=True)
        var = jnp.mean((x - mu) * (x - mu), axis=-1, keepdims=True)
        return (x - mu) * lax.rsqrt(var + 1e-6) * g + b

    def gelu(x):                                   # tanh approximation (EUP), f32
        c = 0.7978845608028654
        return 0.5 * x * (1.0 + jnp.tanh(c * (x + 0.044715 * x * x * x)))

    def softmax(x):                                # f32, EUP reciprocal
        m = jnp.max(x, axis=-1, keepdims=True)
        e = jnp.exp(x - m)
        return e * pl.reciprocal(jnp.sum(e, axis=-1, keepdims=True), approx=True)

    scale = 1.0 / math.sqrt(D)

    acts = acts_ref[...]
    patches = acts[A_PATCH:A_PATCH + NP]           # (NP, 128)  zero-padded patches
    toks0 = acts[A_TOK:A_TOK + NTOK]               # (NTOK, D)
    pos = acts[A_POS:A_POS + NP]                   # (NP, D)
    vecs = acts[A_VEC:A_VEC + 8]                   # (8, D)
    b_patch = vecs[0:1]
    ln1_g, ln1_b = vecs[1:2], vecs[2:3]
    ln2_g, ln2_b = vecs[3:4], vecs[4:5]
    w_iou = vecs[5:6]

    w_patch = w128_ref[0:PDP]                      # (128, D)
    wo1 = w128_ref[PDP:PDP + D]                    # (D, D)
    w_up2 = w128_ref[PDP + D:PDP + 2 * D]          # (D, D)
    w_mlp2 = w128_ref[PDP + 2 * D:PDP + 2 * D + DH]  # (DH, D)

    # ---------------- image encoder -----------------------------------
    x = mm(patches, w_patch) + b_patch + pos                              # (NP, D)

    h = layernorm(x, ln1_g, ln1_b)
    qkv = mm(h, w384_ref[0])                                              # (NP, 3D)
    q, k, v = qkv[:, 0:D], qkv[:, D:2 * D], qkv[:, 2 * D:3 * D]
    attn = softmax(mm_nt(q, k) * scale)                                   # (NP, NP)
    x = x + mm(mm(attn, v), wo1)

    h = layernorm(x, ln2_g, ln2_b)
    x = x + mm(gelu(mm(h, w256_ref[0])), w_mlp2)
    img_emb = x                                                           # (NP, D)

    # ---------------- mask decoder -------------------------------------
    # K2 | V2 | up1 fused into one (NP, 3D) matmul.
    kvu = mm(img_emb, w384_ref[1])                                        # (NP, 3D)
    k2, v2, up1 = kvu[:, 0:D], kvu[:, D:2 * D], kvu[:, 2 * D:3 * D]

    # Q2 | (toks @ w_hyper) fused into one (NTOK, 2D) matmul.
    q2h = mm(toks0, w256_ref[1])                                          # (NTOK, 2D)
    q2 = q2h[:, 0:D]
    hyper0 = q2h[0:1, D:2 * D]                     # mask_token @ w_hyper

    attn2 = softmax(mm_nt(q2, k2) * scale)                                # (NTOK, NP)
    # (attnV @ wo2) | (attnV @ wo2 @ w_hyper) fused into one (NTOK, 2D) matmul.
    proj = mm(mm(attn2, v2), w256_ref[2])                                 # (NTOK, 2D)
    toks = toks0 + proj[:, 0:D]
    hyper = hyper0 + proj[0:1, D:2 * D]            # == (toks after attn)[0] @ w_hyper

    iou_tok = toks[1:2, :]                                                # (1, D)

    up = mm(gelu(up1), w_up2)                                             # (NP, D)

    # Epilogue: only the consumed elements are written (no full-tile zero fill).
    out_ref[0:1, 0:NP] = mm_nt(hyper, up)                                 # (1, NP)
    out_ref[1:2, 0:1] = jnp.sum(iou_tok * w_iou, axis=-1, keepdims=True)  # (1, 1)


# ---------------------------------------------------------------- params
def init_params(key):
    keys = jax.random.split(key, 24)

    def w(k, shape, scale=None):
        if scale is None:
            scale = 1.0 / math.sqrt(shape[0])
        return jax.random.normal(k, shape, jnp.float32) * scale

    return dict(
        w_patch=w(keys[0], (PD, D)),
        b_patch=jnp.zeros((1, D), jnp.float32),
        pos_embed=w(keys[1], (NP, D), 0.02),
        ln1_g=jnp.ones((1, D), jnp.float32),
        ln1_b=jnp.zeros((1, D), jnp.float32),
        wq=w(keys[2], (D, D)), wk=w(keys[3], (D, D)),
        wv=w(keys[4], (D, D)), wo=w(keys[5], (D, D)),
        ln2_g=jnp.ones((1, D), jnp.float32),
        ln2_b=jnp.zeros((1, D), jnp.float32),
        w_mlp1=w(keys[6], (D, DH)), w_mlp2=w(keys[7], (DH, D)),
        pe_gauss=w(keys[8], (2, D // 2), 1.0),
        pt_pos=w(keys[9], (1, D), 0.02),
        pt_neg=w(keys[10], (1, D), 0.02),
        mask_token=w(keys[11], (1, D), 0.02),
        iou_token=w(keys[12], (1, D), 0.02),
        wq2=w(keys[13], (D, D)), wk2=w(keys[14], (D, D)),
        wv2=w(keys[15], (D, D)), wo2=w(keys[16], (D, D)),
        w_up1=w(keys[17], (D, D)), w_up2=w(keys[18], (D, D)),
        w_hyper=w(keys[19], (D, D)),
        w_iou=w(keys[20], (1, D), 1.0),
    )


def pack_params(p):
    """One-time packing of the 21 raw parameters into 3 weight slabs (bf16)
    plus a small f32 vector slab; decoder fusions are pre-baked here."""
    bf16 = jnp.bfloat16
    zrow = jnp.zeros((1, D), jnp.float32)

    # f32 per-row vectors (layernorm params, biases, iou head) + pos embedding.
    vecs = jnp.concatenate(
        [p["b_patch"], p["ln1_g"], p["ln1_b"], p["ln2_g"], p["ln2_b"],
         p["w_iou"], zrow, zrow], axis=0)                                # (8, D)
    pos_vecs = jnp.concatenate([p["pos_embed"], vecs], axis=0)           # (24, D)

    # lane-128 weight slab (bf16): patch embed | wo1 | w_up2 | w_mlp2
    w_patch = jnp.zeros((PDP, D), jnp.float32).at[:PD].set(p["w_patch"])
    w128 = jnp.concatenate(
        [w_patch, p["wo"], p["w_up2"], p["w_mlp2"]], axis=0).astype(bf16)  # (640, 128)

    # lane-384 slab (bf16): encoder QKV, decoder KV with w_up1 in the third slot.
    w384 = jnp.stack(
        [jnp.concatenate([p["wq"], p["wk"], p["wv"]], axis=1),
         jnp.concatenate([p["wk2"], p["wv2"], p["w_up1"]], axis=1)],
        axis=0).astype(bf16)                                             # (2, D, 3D)

    # lane-256 slab (bf16): w_mlp1, [wq2|w_hyper], [wo2|wo2@w_hyper].
    wo2_hyper = p["wo2"] @ p["w_hyper"]
    w256 = jnp.stack(
        [p["w_mlp1"],
         jnp.concatenate([p["wq2"], p["w_hyper"]], axis=1),
         jnp.concatenate([p["wo2"], wo2_hyper], axis=1)],
        axis=0).astype(bf16)                                             # (3, D, 2D)

    return dict(
        pos_vecs=pos_vecs, w128=w128, w384=w384, w256=w256,
        # prompt-encoder params stay on the host/XLA side (used in the wrapper):
        pe_gauss=p["pe_gauss"], pt_pos=p["pt_pos"], pt_neg=p["pt_neg"],
        mask_token=p["mask_token"], iou_token=p["iou_token"],
    )


# ---------------------------------------------------------------- wrapper
def sam_neuro_2d_forward(packed, input_image, point_coords, point_labels):
    """Mirrors SAMneuro2D.forward.

    input_image : (1, 1, H, W) float32  (NCHW like the PyTorch module)
    point_coords: (1, NPTS, 2) float32  (x, y) in pixels
    point_labels: (1, NPTS)    int32    (1 = fg, 0 = bg)
    returns (y_mask (H, W) bool, scores (1,) f32, low_res_masks (HP, WP) f32)
    """
    assert input_image.shape == (1, 1, H, W)
    assert point_coords.shape == (1, NPTS, 2), "wrapper is specialized to NPTS points"
    assert point_labels.shape == (1, NPTS)

    # --- preprocessing, identical to the module ------------------------
    # numpy: transpose(2, 3, 1, 0).repeat(3, axis=2).squeeze() -> (H, W, 3)
    img = jnp.transpose(input_image, (2, 3, 1, 0))      # (H, W, 1, 1)
    img = jnp.repeat(img, 3, axis=2)                    # (H, W, 3, 1)
    img = jnp.squeeze(img, axis=3)                      # (H, W, 3)
    img = (img - 0.5) / 0.5                             # synthetic pixel normalize

    # patchify -> (NP, PD) then zero-pad the feature axis to a full lane tile
    patches = img.reshape(HP, P, WP, P, 3)
    patches = patches.transpose(0, 2, 1, 3, 4).reshape(NP, PD).astype(jnp.float32)
    patches = jnp.pad(patches, ((0, 0), (0, PDP - PD)))  # (NP, 128)

    # --- prompt encoder (points), done in the wrapper -------------------
    coords = point_coords[0].astype(jnp.float32) / jnp.array([W, H], jnp.float32)
    c = coords * (2.0 * math.pi)                         # (n, 2)
    proj = c @ packed["pe_gauss"]                        # (n, D//2)
    pt_pe = jnp.concatenate([jnp.sin(proj), jnp.cos(proj)], axis=-1)  # (n, D)
    lbl = point_labels[0].astype(jnp.float32).reshape(NPTS, 1)
    pt_tokens = pt_pe + jnp.where(lbl > 0.5, packed["pt_pos"], packed["pt_neg"])

    toks_in = jnp.concatenate(
        [packed["mask_token"], packed["iou_token"], pt_tokens,
         jnp.zeros((NTOK - 2 - NPTS, D), jnp.float32)], axis=0)       # (NTOK, D)

    # single f32 activation slab: [patches | tokens | pos | vecs]  -> (48, 128)
    acts = jnp.concatenate([patches, toks_in, packed["pos_vecs"]], axis=0)

    vmem = pl.BlockSpec(memory_space=pltpu.MemorySpace.VMEM)
    cost = pl.CostEstimate(flops=8_100_000, transcendentals=6_600,
                           bytes_accessed=590_000)
    out = pl.pallas_call(
        mini_sam_kernel,
        out_shape=jax.ShapeDtypeStruct((8, 128), jnp.float32),
        in_specs=[vmem] * 4,
        out_specs=vmem,
        cost_estimate=cost,
    )(acts, packed["w128"], packed["w384"], packed["w256"])

    # Output contract: ONLY out[0, :NP] and out[1, 0] are defined by the kernel.
    low_res_masks = out[0, 0:NP].reshape(HP, WP)         # (H_down, W_down)
    # TODO(synk): SAM upsamples logits with bilinear interpolation; nearest used here.
    y_logits = jnp.repeat(jnp.repeat(low_res_masks, P, axis=0), P, axis=1)
    y_mask = y_logits > 0.0                              # return_logits=False -> binary
    scores = out[1, 0].reshape(1)
    return y_mask, scores, low_res_masks


sam_neuro_2d_forward_jit = jax.jit(sam_neuro_2d_forward)


# ---------------------------------------------------------------- main
if __name__ == "__main__":
    key = jax.random.PRNGKey(0)
    k_img, k_pts, k_par = jax.random.split(key, 3)

    input_image = jax.random.uniform(k_img, (1, 1, H, W), jnp.float32)
    point_coords = jax.random.uniform(k_pts, (1, NPTS, 2), jnp.float32,
                                      minval=0.0, maxval=float(W))
    point_labels = jnp.array([[1, 0]], dtype=jnp.int32)

    params = init_params(k_par)
    packed = pack_params(params)

    y_mask, scores, low_res_masks = sam_neuro_2d_forward_jit(
        packed, input_image, point_coords, point_labels)
    jax.block_until_ready((y_mask, scores, low_res_masks))

    assert y_mask.shape == (H, W)
    assert scores.shape == (1,)
    assert low_res_masks.shape == (HP, WP)
    print("KERNEL_OK")
</pallas_src>

<mosaic_0001>
module attributes {stable_mosaic.version = 11 : i64} {
  func.func @mini_sam_kernel(%arg0: memref<48x128xf32, #tpu.memory_space<vmem>>, %arg1: memref<640x128xbf16, #tpu.memory_space<vmem>>, %arg2: memref<2x128x384xbf16, #tpu.memory_space<vmem>>, %arg3: memref<3x128x256xbf16, #tpu.memory_space<vmem>>, %arg4: memref<8x128xf32, #tpu.memory_space<vmem>>) attributes {dimension_semantics = [], scalar_prefetch = 0 : i64, scratch_operands = 0 : i64, tpu.core_type = #tpu.core_type<tc>} {
    %c0 = arith.constant 0 : index
    %c0_0 = arith.constant 0 : index
    %0 = vector.load %arg0[%c0, %c0_0] : memref<48x128xf32, #tpu.memory_space<vmem>>, vector<48x128xf32>
    %1 = vector.extract_strided_slice %0 {offsets = [0, 0], sizes = [16, 128], strides = [1, 1]} : vector<48x128xf32> to vector<16x128xf32>
    %2 = vector.extract_strided_slice %0 {offsets = [16, 0], sizes = [8, 128], strides = [1, 1]} : vector<48x128xf32> to vector<8x128xf32>
    %3 = vector.extract_strided_slice %0 {offsets = [24, 0], sizes = [16, 128], strides = [1, 1]} : vector<48x128xf32> to vector<16x128xf32>
    %4 = vector.extract_strided_slice %0 {offsets = [40, 0], sizes = [8, 128], strides = [1, 1]} : vector<48x128xf32> to vector<8x128xf32>
    %5 = vector.extract_strided_slice %4 {offsets = [0, 0], sizes = [1, 128], strides = [1, 1]} : vector<8x128xf32> to vector<1x128xf32>
    %6 = vector.extract_strided_slice %4 {offsets = [1, 0], sizes = [1, 128], strides = [1, 1]} : vector<8x128xf32> to vector<1x128xf32>
    %7 = vector.extract_strided_slice %4 {offsets = [2, 0], sizes = [1, 128], strides = [1, 1]} : vector<8x128xf32> to vector<1x128xf32>
    %8 = vector.extract_strided_slice %4 {offsets = [3, 0], sizes = [1, 128], strides = [1, 1]} : vector<8x128xf32> to vector<1x128xf32>
    %9 = vector.extract_strided_slice %4 {offsets = [4, 0], sizes = [1, 128], strides = [1, 1]} : vector<8x128xf32> to vector<1x128xf32>
    %10 = vector.extract_strided_slice %4 {offsets = [5, 0], sizes = [1, 128], strides = [1, 1]} : vector<8x128xf32> to vector<1x128xf32>
    %c0_1 = arith.constant 0 : index
    %c0_2 = arith.constant 0 : index
    %11 = vector.load %arg1[%c0_1, %c0_2] : memref<640x128xbf16, #tpu.memory_space<vmem>>, vector<128x128xbf16>
    %c128 = arith.constant 128 : index
    %c0_3 = arith.constant 0 : index
    %12 = vector.load %arg1[%c128, %c0_3] : memref<640x128xbf16, #tpu.memory_space<vmem>>, vector<128x128xbf16>
    %c256 = arith.constant 256 : index
    %c0_4 = arith.constant 0 : index
    %13 = vector.load %arg1[%c256, %c0_4] : memref<640x128xbf16, #tpu.memory_space<vmem>>, vector<128x128xbf16>
    %c384 = arith.constant 384 : index
    %c0_5 = arith.constant 0 : index
    %14 = vector.load %arg1[%c384, %c0_5] : memref<640x128xbf16, #tpu.memory_space<vmem>>, vector<256x128xbf16>
    %15 = arith.truncf %1 : vector<16x128xf32> to vector<16x128xbf16>
    %cst = arith.constant dense<0.000000e+00> : vector<16x128xf32>
    %16 = tpu.matmul %15, %11, %cst {dimension_numbers = #tpu.dot_dimension_numbers<[1], [0], [0], [1], [0, 0, 1, 1], [], []>} : vector<16x128xbf16>, vector<128x128xbf16>, vector<16x128xf32> -> vector<16x128xf32>
    %17 = vector.broadcast %5 : vector<1x128xf32> to vector<16x128xf32>
    %18 = arith.addf %16, %17 : vector<16x128xf32>
    %19 = arith.addf %18, %3 : vector<16x128xf32>
    %cst_6 = arith.constant dense<0.000000e+00> : vector<16xf32>
    %20 = vector.multi_reduction <add>, %19, %cst_6 [1] : vector<16x128xf32> to vector<16xf32>
    %21 = vector.shape_cast %20 : vector<16xf32> to vector<16x1xf32>
    %cst_7 = arith.constant 1.280000e+02 : f32
    %22 = vector.broadcast %cst_7 : f32 to vector<16x1xf32>
    %23 = arith.divf %21, %22 : vector<16x1xf32>
    %24 = vector.broadcast %23 : vector<16x1xf32> to vector<16x128xf32>
    %25 = arith.subf %19, %24 : vector<16x128xf32>
    %26 = vector.broadcast %23 : vector<16x1xf32> to vector<16x128xf32>
    %27 = arith.subf %19, %26 : vector<16x128xf32>
    %28 = arith.mulf %25, %27 : vector<16x128xf32>
    %cst_8 = arith.constant dense<0.000000e+00> : vector<16xf32>
    %29 = vector.multi_reduction <add>, %28, %cst_8 [1] : vector<16x128xf32> to vector<16xf32>
    %30 = vector.shape_cast %29 : vector<16xf32> to vector<16x1xf32>
    %cst_9 = arith.constant 1.280000e+02 : f32
    %31 = vector.broadcast %cst_9 : f32 to vector<16x1xf32>
    %32 = arith.divf %30, %31 : vector<16x1xf32>
    %33 = vector.broadcast %23 : vector<16x1xf32> to vector<16x128xf32>
    %34 = arith.subf %19, %33 : vector<16x128xf32>
    %cst_10 = arith.constant 9.99999997E-7 : f32
    %35 = vector.broadcast %cst_10 : f32 to vector<16x1xf32>
    %36 = arith.addf %32, %35 : vector<16x1xf32>
    %37 = math.rsqrt %36 : vector<16x1xf32>
    %38 = vector.broadcast %37 : vector<16x1xf32> to vector<16x128xf32>
    %39 = arith.mulf %34, %38 : vector<16x128xf32>
    %40 = vector.broadcast %6 : vector<1x128xf32> to vector<16x128xf32>
    %41 = arith.mulf %39, %40 : vector<16x128xf32>
    %42 = vector.broadcast %7 : vector<1x128xf32> to vector<16x128xf32>
    %43 = arith.addf %41, %42 : vector<16x128xf32>
    %c0_11 = arith.constant 0 : index
    %c0_12 = arith.constant 0 : index
    %c0_13 = arith.constant 0 : index
    %44 = vector.load %arg2[%c0_11, %c0_12, %c0_13] : memref<2x128x384xbf16, #tpu.memory_space<vmem>>, vector<1x128x384xbf16>
    %45 = vector.shape_cast %44 : vector<1x128x384xbf16> to vector<128x384xbf16>
    %46 = arith.truncf %43 : vector<16x128xf32> to vector<16x128xbf16>
    %cst_14 = arith.constant dense<0.000000e+00> : vector<16x384xf32>
    %47 = tpu.matmul %46, %45, %cst_14 {dimension_numbers = #tpu.dot_dimension_numbers<[1], [0], [0], [1], [0, 0, 1, 1], [], []>} : vector<16x128xbf16>, vector<128x384xbf16>, vector<16x384xf32> -> vector<16x384xf32>
    %48 = vector.extract_strided_slice %47 {offsets = [0, 0], sizes = [16, 128], strides = [1, 1]} : vector<16x384xf32> to vector<16x128xf32>
    %49 = vector.extract_strided_slice %47 {offsets = [0, 128], sizes = [16, 128], strides = [1, 1]} : vector<16x384xf32> to vector<16x128xf32>
    %50 = vector.extract_strided_slice %47 {offsets = [0, 256], sizes = [16, 128], strides = [1, 1]} : vector<16x384xf32> to vector<16x128xf32>
    %51 = arith.truncf %48 : vector<16x128xf32> to vector<16x128xbf16>
    %52 = arith.truncf %49 : vector<16x128xf32> to vector<16x128xbf16>
    %cst_15 = arith.constant dense<0.000000e+00> : vector<16x16xf32>
    %53 = tpu.matmul %51, %52, %cst_15 {dimension_numbers = #tpu.dot_dimension_numbers<[1], [1], [0], [0], [0, 0, 1, 0], [], []>} : vector<16x128xbf16>, vector<16x128xbf16>, vector<16x16xf32> -> vector<16x16xf32>
    %cst_16 = arith.constant 0.0883883461 : f32
    %54 = vector.broadcast %cst_16 : f32 to vector<16x16xf32>
    %55 = arith.mulf %53, %54 : vector<16x16xf32>
    %cst_17 = arith.constant dense<0xFF800000> : vector<16xf32>
    %56 = vector.multi_reduction <maximumf>, %55, %cst_17 [1] : vector<16x16xf32> to vector<16xf32>
    %57 = vector.shape_cast %56 : vector<16xf32> to vector<16x1xf32>
    %58 = vector.broadcast %57 : vector<16x1xf32> to vector<16x16xf32>
    %59 = arith.subf %55, %58 : vector<16x16xf32>
    %60 = math.exp %59 : vector<16x16xf32>
    %cst_18 = arith.constant dense<0.000000e+00> : vector<16xf32>
    %61 = vector.multi_reduction <add>, %60, %cst_18 [1] : vector<16x16xf32> to vector<16xf32>
    %62 = vector.shape_cast %61 : vector<16xf32> to vector<16x1xf32>
    %63 = tpu.reciprocal %62 {approx = true} : vector<16x1xf32> -> vector<16x1xf32>
    %64 = vector.broadcast %63 : vector<16x1xf32> to vector<16x16xf32>
    %65 = arith.mulf %60, %64 : vector<16x16xf32>
    %66 = arith.truncf %65 : vector<16x16xf32> to vector<16x16xbf16>
    %67 = arith.truncf %50 : vector<16x128xf32> to vector<16x128xbf16>
    %cst_19 = arith.constant dense<0.000000e+00> : vector<16x128xf32>
    %68 = tpu.matmul %66, %67, %cst_19 {dimension_numbers = #tpu.dot_dimension_numbers<[1], [0], [0], [1], [0, 0, 1, 1], [], []>} : vector<16x16xbf16>, vector<16x128xbf16>, vector<16x128xf32> -> vector<16x128xf32>
    %69 = arith.truncf %68 : vector<16x128xf32> to vector<16x128xbf16>
    %cst_20 = arith.constant dense<0.000000e+00> : vector<16x128xf32>
    %70 = tpu.matmul %69, %12, %cst_20 {dimension_numbers = #tpu.dot_dimension_numbers<[1], [0], [0], [1], [0, 0, 1, 1], [], []>} : vector<16x128xbf16>, vector<128x128xbf16>, vector<16x128xf32> -> vector<16x128xf32>
    %71 = arith.addf %19, %70 : vector<16x128xf32>
    %cst_21 = arith.constant dense<0.000000e+00> : vector<16xf32>
    %72 = vector.multi_reduction <add>, %71, %cst_21 [1] : vector<16x128xf32> to vector<16xf32>
    %73 = vector.shape_cast %72 : vector<16xf32> to vector<16x1xf32>
    %cst_22 = arith.constant 1.280000e+02 : f32
    %74 = vector.broadcast %cst_22 : f32 to vector<16x1xf32>
    %75 = arith.divf %73, %74 : vector<16x1xf32>
    %76 = vector.broadcast %75 : vector<16x1xf32> to vector<16x128xf32>
    %77 = arith.subf %71, %76 : vector<16x128xf32>
    %78 = vector.broadcast %75 : vector<16x1xf32> to vector<16x128xf32>
    %79 = arith.subf %71, %78 : vector<16x128xf32>
    %80 = arith.mulf %77, %79 : vector<16x128xf32>
    %cst_23 = arith.constant dense<0.000000e+00> : vector<16xf32>
    %81 = vector.multi_reduction <add>, %80, %cst_23 [1] : vector<16x128xf32> to vector<16xf32>
    %82 = vector.shape_cast %81 : vector<16xf32> to vector<16x1xf32>
    %cst_24 = arith.constant 1.280000e+02 : f32
    %83 = vector.broadcast %cst_24 : f32 to vector<16x1xf32>
    %84 = arith.divf %82, %83 : vector<16x1xf32>
    %85 = vector.broadcast %75 : vector<16x1xf32> to vector<16x128xf32>
    %86 = arith.subf %71, %85 : vector<16x128xf32>
    %cst_25 = arith.constant 9.99999997E-7 : f32
    %87 = vector.broadcast %cst_25 : f32 to vector<16x1xf32>
    %88 = arith.addf %84, %87 : vector<16x1xf32>
    %89 = math.rsqrt %88 : vector<16x1xf32>
    %90 = vector.broadcast %89 : vector<16x1xf32> to vector<16x128xf32>
    %91 = arith.mulf %86, %90 : vector<16x128xf32>
    %92 = vector.broadcast %8 : vector<1x128xf32> to vector<16x128xf32>
    %93 = arith.mulf %91, %92 : vector<16x128xf32>
    %94 = vector.broadcast %9 : vector<1x128xf32> to vector<16x128xf32>
    %95 = arith.addf %93, %94 : vector<16x128xf32>
    %c0_26 = arith.constant 0 : index
    %c0_27 = arith.constant 0 : index
    %c0_28 = arith.constant 0 : index
    %96 = vector.load %arg3[%c0_26, %c0_27, %c0_28] : memref<3x128x256xbf16, #tpu.memory_space<vmem>>, vector<1x128x256xbf16>
    %97 = vector.shape_cast %96 : vector<1x128x256xbf16> to vector<128x256xbf16>
    %98 = arith.truncf %95 : vector<16x128xf32> to vector<16x128xbf16>
    %cst_29 = arith.constant dense<0.000000e+00> : vector<16x256xf32>
    %99 = tpu.matmul %98, %97, %cst_29 {dimension_numbers = #tpu.dot_dimension_numbers<[1], [0], [0], [1], [0, 0, 1, 1], [], []>} : vector<16x128xbf16>, vector<128x256xbf16>, vector<16x256xf32> -> vector<16x256xf32>
    %cst_30 = arith.constant 5.000000e-01 : f32
    %100 = vector.broadcast %cst_30 : f32 to vector<16x256xf32>
    %101 = arith.mulf %100, %99 : vector<16x256xf32>
    %cst_31 = arith.constant 4.471500e-02 : f32
    %102 = vector.broadcast %cst_31 : f32 to vector<16x256xf32>
    %103 = arith.mulf %102, %99 : vector<16x256xf32>
    %104 = arith.mulf %103, %99 : vector<16x256xf32>
    %105 = arith.mulf %104, %99 : vector<16x256xf32>
    %106 = arith.addf %99, %105 : vector<16x256xf32>
    %cst_32 = arith.constant 0.797884583 : f32
    %107 = vector.broadcast %cst_32 : f32 to vector<16x256xf32>
    %108 = arith.mulf %107, %106 : vector<16x256xf32>
    %109 = math.tanh %108 : vector<16x256xf32>
    %cst_33 = arith.constant 1.000000e+00 : f32
    %110 = vector.broadcast %cst_33 : f32 to vector<16x256xf32>
    %111 = arith.addf %110, %109 : vector<16x256xf32>
    %112 = arith.mulf %101, %111 : vector<16x256xf32>
    %113 = arith.truncf %112 : vector<16x256xf32> to vector<16x256xbf16>
    %cst_34 = arith.constant dense<0.000000e+00> : vector<16x128xf32>
    %114 = tpu.matmul %113, %14, %cst_34 {dimension_numbers = #tpu.dot_dimension_numbers<[1], [0], [0], [1], [0, 0, 1, 1], [], []>} : vector<16x256xbf16>, vector<256x128xbf16>, vector<16x128xf32> -> vector<16x128xf32>
    %115 = arith.addf %71, %114 : vector<16x128xf32>
    %c1 = arith.constant 1 : index
    %c0_35 = arith.constant 0 : index
    %c0_36 = arith.constant 0 : index
    %116 = vector.load %arg2[%c1, %c0_35, %c0_36] : memref<2x128x384xbf16, #tpu.memory_space<vmem>>, vector<1x128x384xbf16>
    %117 = vector.shape_cast %116 : vector<1x128x384xbf16> to vector<128x384xbf16>
    %118 = arith.truncf %115 : vector<16x128xf32> to vector<16x128xbf16>
    %cst_37 = arith.constant dense<0.000000e+00> : vector<16x384xf32>
    %119 = tpu.matmul %118, %117, %cst_37 {dimension_numbers = #tpu.dot_dimension_numbers<[1], [0], [0], [1], [0, 0, 1, 1], [], []>} : vector<16x128xbf16>, vector<128x384xbf16>, vector<16x384xf32> -> vector<16x384xf32>
    %120 = vector.extract_strided_slice %119 {offsets = [0, 0], sizes = [16, 128], strides = [1, 1]} : vector<16x384xf32> to vector<16x128xf32>
    %121 = vector.extract_strided_slice %119 {offsets = [0, 128], sizes = [16, 128], strides = [1, 1]} : vector<16x384xf32> to vector<16x128xf32>
    %122 = vector.extract_strided_slice %119 {offsets = [0, 256], sizes = [16, 128], strides = [1, 1]} : vector<16x384xf32> to vector<16x128xf32>
    %c1_38 = arith.constant 1 : index
    %c0_39 = arith.constant 0 : index
    %c0_40 = arith.constant 0 : index
    %123 = vector.load %arg3[%c1_38, %c0_39, %c0_40] : memref<3x128x256xbf16, #tpu.memory_space<vmem>>, vector<1x128x256xbf16>
    %124 = vector.shape_cast %123 : vector<1x128x256xbf16> to vector<128x256xbf16>
    %125 = arith.truncf %2 : vector<8x128xf32> to vector<8x128xbf16>
    %cst_41 = arith.constant dense<0.000000e+00> : vector<8x256xf32>
    %126 = tpu.matmul %125, %124, %cst_41 {dimension_numbers = #tpu.dot_dimension_numbers<[1], [0], [0], [1], [0, 0, 1, 1], [], []>} : vector<8x128xbf16>, vector<128x256xbf16>, vector<8x256xf32> -> vector<8x256xf32>
    %127 = vector.extract_strided_slice %126 {offsets = [0, 0], sizes = [8, 128], strides = [1, 1]} : vector<8x256xf32> to vector<8x128xf32>
    %128 = vector.extract_strided_slice %126 {offsets = [0, 128], sizes = [1, 128], strides = [1, 1]} : vector<8x256xf32> to vector<1x128xf32>
    %129 = arith.truncf %127 : vector<8x128xf32> to vector<8x128xbf16>
    %130 = arith.truncf %120 : vector<16x128xf32> to vector<16x128xbf16>
    %cst_42 = arith.constant dense<0.000000e+00> : vector<8x16xf32>
    %131 = tpu.matmul %129, %130, %cst_42 {dimension_numbers = #tpu.dot_dimension_numbers<[1], [1], [0], [0], [0, 0, 1, 0], [], []>} : vector<8x128xbf16>, vector<16x128xbf16>, vector<8x16xf32> -> vector<8x16xf32>
    %cst_43 = arith.constant 0.0883883461 : f32
    %132 = vector.broadcast %cst_43 : f32 to vector<8x16xf32>
    %133 = arith.mulf %131, %132 : vector<8x16xf32>
    %cst_44 = arith.constant dense<0xFF800000> : vector<8xf32>
    %134 = vector.multi_reduction <maximumf>, %133, %cst_44 [1] : vector<8x16xf32> to vector<8xf32>
    %135 = vector.shape_cast %134 : vector<8xf32> to vector<8x1xf32>
    %136 = vector.broadcast %135 : vector<8x1xf32> to vector<8x16xf32>
    %137 = arith.subf %133, %136 : vector<8x16xf32>
    %138 = math.exp %137 : vector<8x16xf32>
    %cst_45 = arith.constant dense<0.000000e+00> : vector<8xf32>
    %139 = vector.multi_reduction <add>, %138, %cst_45 [1] : vector<8x16xf32> to vector<8xf32>
    %140 = vector.shape_cast %139 : vector<8xf32> to vector<8x1xf32>
    %141 = tpu.reciprocal %140 {approx = true} : vector<8x1xf32> -> vector<8x1xf32>
    %142 = vector.broadcast %141 : vector<8x1xf32> to vector<8x16xf32>
    %143 = arith.mulf %138, %142 : vector<8x16xf32>
    %144 = arith.truncf %143 : vector<8x16xf32> to vector<8x16xbf16>
    %145 = arith.truncf %121 : vector<16x128xf32> to vector<16x128xbf16>
    %cst_46 = arith.constant dense<0.000000e+00> : vector<8x128xf32>
    %146 = tpu.matmul %144, %145, %cst_46 {dimension_numbers = #tpu.dot_dimension_numbers<[1], [0], [0], [1], [0, 0, 1, 1], [], []>} : vector<8x16xbf16>, vector<16x128xbf16>, vector<8x128xf32> -> vector<8x128xf32>
    %c2 = arith.constant 2 : index
    %c0_47 = arith.constant 0 : index
    %c0_48 = arith.constant 0 : index
    %147 = vector.load %arg3[%c2, %c0_47, %c0_48] : memref<3x128x256xbf16, #tpu.memory_space<vmem>>, vector<1x128x256xbf16>
    %148 = vector.shape_cast %147 : vector<1x128x256xbf16> to vector<128x256xbf16>
    %149 = arith.truncf %146 : vector<8x128xf32> to vector<8x128xbf16>
    %cst_49 = arith.constant dense<0.000000e+00> : vector<8x256xf32>
    %150 = tpu.matmul %149, %148, %cst_49 {dimension_numbers = #tpu.dot_dimension_numbers<[1], [0], [0], [1], [0, 0, 1, 1], [], []>} : vector<8x128xbf16>, vector<128x256xbf16>, vector<8x256xf32> -> vector<8x256xf32>
    %151 = vector.extract_strided_slice %150 {offsets = [0, 0], sizes = [8, 128], strides = [1, 1]} : vector<8x256xf32> to vector<8x128xf32>
    %152 = arith.addf %2, %151 : vector<8x128xf32>
    %153 = vector.extract_strided_slice %150 {offsets = [0, 128], sizes = [1, 128], strides = [1, 1]} : vector<8x256xf32> to vector<1x128xf32>
    %154 = arith.addf %128, %153 : vector<1x128xf32>
    %155 = vector.extract_strided_slice %152 {offsets = [1, 0], sizes = [1, 128], strides = [1, 1]} : vector<8x128xf32> to vector<1x128xf32>
    %cst_50 = arith.constant 5.000000e-01 : f32
    %156 = vector.broadcast %cst_50 : f32 to vector<16x128xf32>
    %157 = arith.mulf %156, %122 : vector<16x128xf32>
    %cst_51 = arith.constant 4.471500e-02 : f32
    %158 = vector.broadcast %cst_51 : f32 to vector<16x128xf32>
    %159 = arith.mulf %158, %122 : vector<16x128xf32>
    %160 = arith.mulf %159, %122 : vector<16x128xf32>
    %161 = arith.mulf %160, %122 : vector<16x128xf32>
    %162 = arith.addf %122, %161 : vector<16x128xf32>
    %cst_52 = arith.constant 0.797884583 : f32
    %163 = vector.broadcast %cst_52 : f32 to vector<16x128xf32>
    %164 = arith.mulf %163, %162 : vector<16x128xf32>
    %165 = math.tanh %164 : vector<16x128xf32>
    %cst_53 = arith.constant 1.000000e+00 : f32
    %166 = vector.broadcast %cst_53 : f32 to vector<16x128xf32>
    %167 = arith.addf %166, %165 : vector<16x128xf32>
    %168 = arith.mulf %157, %167 : vector<16x128xf32>
    %169 = arith.truncf %168 : vector<16x128xf32> to vector<16x128xbf16>
    %cst_54 = arith.constant dense<0.000000e+00> : vector<16x128xf32>
    %170 = tpu.matmul %169, %13, %cst_54 {dimension_numbers = #tpu.dot_dimension_numbers<[1], [0], [0], [1], [0, 0, 1, 1], [], []>} : vector<16x128xbf16>, vector<128x128xbf16>, vector<16x128xf32> -> vector<16x128xf32>
    %171 = arith.truncf %154 : vector<1x128xf32> to vector<1x128xbf16>
    %172 = arith.truncf %170 : vector<16x128xf32> to vector<16x128xbf16>
    %cst_55 = arith.constant dense<0.000000e+00> : vector<1x16xf32>
    %173 = tpu.matmul %171, %172, %cst_55 {dimension_numbers = #tpu.dot_dimension_numbers<[1], [1], [0], [0], [0, 0, 1, 0], [], []>} : vector<1x128xbf16>, vector<16x128xbf16>, vector<1x16xf32> -> vector<1x16xf32>
    %c0_56 = arith.constant 0 : index
    %c0_57 = arith.constant 0 : index
    %174 = vector.load %arg4[%c0_56, %c0_57] : memref<8x128xf32, #tpu.memory_space<vmem>>, vector<1x16xf32>
    tpu.vector_store %arg4[%c0_56, %c0_57], %173 {strides = array<i32>} : memref<8x128xf32, #tpu.memory_space<vmem>>, vector<1x16xf32>,
    %175 = arith.mulf %155, %10 : vector<1x128xf32>
    %cst_58 = arith.constant dense<0.000000e+00> : vector<1xf32>
    %176 = vector.multi_reduction <add>, %175, %cst_58 [1] : vector<1x128xf32> to vector<1xf32>
    %177 = vector.shape_cast %176 : vector<1xf32> to vector<1x1xf32>
    %c1_59 = arith.constant 1 : index
    %c0_60 = arith.constant 0 : index
    %178 = vector.load %arg4[%c1_59, %c0_60] : memref<8x128xf32, #tpu.memory_space<vmem>>, vector<1x1xf32>
    tpu.vector_store %arg4[%c1_59, %c0_60], %177 {strides = array<i32>} : memref<8x128xf32, #tpu.memory_space<vmem>>, vector<1x1xf32>,
    return
  }
}

</mosaic_0001>

<llo_original>
// kernel: squeeze.6
$region0: #{squeeze.6}
  %s0 = inlined_call_operand.vmem [shape: f32[16], index: 0, kind: input, shape index: {}]
  %s1 = inlined_call_operand.vmem [shape: f32[4,4], index: 1, kind: output, shape index: {}]
  $region1: #{squeeze.6} parent=0
    #allocation0 [shape = 'u8[4096]{0}', space=vmem, size = 0x1000, scoped, tag = 'scoped mem for output reshape']
    #allocation1 [shape = 'u8[4096]{0}', space=vmem, size = 0x1000, scoped, tag = 'scoped mem for input reshape']
    %s3 = sshllo.u32 0, 1
    %v4 = vld [vmem:[%s0] sm:%s3]
    %5 = vst [vmem:[#allocation1] sm:%s3] %v4
    %v6 = vld [vmem:[#allocation1] sm:$0x1]
    %vm7 = vcmask 31744
    %8 = vst.msk [vmem:[#allocation0] sm:$0x1] %vm7, %v6
    %v9 = vld [vmem:[#allocation1] sm:$0x1]
    %10 = vrot.lane.b32.xlu0 %v9, 124
    %v11 = vpop.permute.xlu0 %10
    %vm12 = vcmask 31744
    %s13 = scalar_lea.vmem [#allocation0], 1
    %14 = vst.msk [vmem:[%s13] sm:$0x1] %vm12, %v11
    %v15 = vld [vmem:[#allocation1] sm:$0x1]
    %16 = vrot.lane.b32.xlu0 %v15, 120
    %v17 = vpop.permute.xlu0 %16
    %vm18 = vcmask 31744
    %s19 = scalar_lea.vmem [#allocation0], 2
    %20 = vst.msk [vmem:[%s19] sm:$0x1] %vm18, %v17
    %v21 = vld [vmem:[#allocation1] sm:$0x1]
    %22 = vrot.lane.b32.xlu0 %v21, 116
    %v23 = vpop.permute.xlu0 %22
    %vm24 = vcmask 31744
    %s25 = scalar_lea.vmem [#allocation0], 3
    %26 = vst.msk [vmem:[%s25] sm:$0x1] %vm24, %v23
    %s28 = sshllo.u32 0, 4
    %v30 = vld [vmem:[#allocation0] sm:%s28]
    %s31 = sshllo.u32 0, 4
    %32 = vst [vmem:[%s1] sm:%s31] %v30

// kernel: sam_neuro_2d_forward.1
$region0: #{sam_neuro_2d_forward.1}
  #allocation0 [shape = 'u32[]', space=smem, size = 0x4, offset = 0x4, fixed_abs, tag = 'smem constant byte address 0x4 - core index']
  #allocation1 [shape = 'u32[144,128]{1,0:T(1,128)}', space=vmem, size = 0x12000, scoped, tag = 'internal scratch']
  %s0 = inlined_call_operand.vmem [shape: f32[48,128], index: 0, kind: input, shape index: {}]
  %s1 = inlined_call_operand.hbm [shape: bf16[640,128], index: 1, kind: input, shape index: {}]
  %s2 = inlined_call_operand.vmem [shape: bf16[2,128,384], index: 2, kind: input, shape index: {}]
  %s3 = inlined_call_operand.vmem [shape: bf16[3,128,256], index: 3, kind: input, shape index: {}]
  %s4 = inlined_call_operand.vmem [shape: f32[8,128], index: 4, kind: output, shape index: {}]
  %s5 = sld [smem:[#allocation0]]
  $region30: #{sam_neuro_2d_forward.1} parent=0
    _
  %s7 = ssub.s32 1, %s5
  %s8 = scalar_select 0, %s7, %s5
  $region1: #{sam_neuro_2d_forward.1} parent=0
    #allocation2 [shape = 'u8[163840]{0}', space=vmem, size = 0x28000, scoped, tag = 'input window, operand 1, single buffered']
    #allocation3 [shape = 's32[1]{0}', space=sflag, size = 0x4, scoped, tag = 'scoped memory for sam_neuro_2d_forward.1']
    %9 = vsyncpa [#allocation3], 0
    // Predicated region
    $region2: #{sam_neuro_2d_forward.1} parent=1 // pred_check
      _
    $region3: #{sam_neuro_2d_forward.1} parent=1 // pred_check_branch
      %11 = sbr.rel (0) target = $region5
    $region4: #{sam_neuro_2d_forward.1} parent=1 // pred_region
      _
    $region5: #{sam_neuro_2d_forward.1} parent=1 // pred_fallthru
      _
    // Predicated region
    $region6: #{sam_neuro_2d_forward.1} parent=1 // pred_check
      _
    $region7: #{sam_neuro_2d_forward.1} parent=1 // pred_check_branch
      %13 = sbr.rel (0) target = $region9
    $region8: #{sam_neuro_2d_forward.1} parent=1 // pred_region
      %s15 = ssub.s32 5120, 5120
      %16 = vsyncadd [#allocation3], %s15
      %s17 = sshll.u32 [#allocation2], 4
      %s18 = int_to_ptr.vmem [resolvable:$true] %s17
      %23 = dma.hbm_to_vmem [thread:$0]  %s1, 5120, %s18, [#allocation3], 64, 64, 4
    $region9: #{sam_neuro_2d_forward.1} parent=1 // pred_fallthru
      _
    // Predicated region
    $region10: #{sam_neuro_2d_forward.1} parent=1 // pred_check
      _
    $region11: #{sam_neuro_2d_forward.1} parent=1 // pred_check_branch
      %25 = sbr.rel (0) target = $region13
    $region12: #{sam_neuro_2d_forward.1} parent=1 // pred_region
      _
    $region13: #{sam_neuro_2d_forward.1} parent=1 // pred_fallthru
      _
    // Predicated region
    $region14: #{sam_neuro_2d_forward.1} parent=1 // pred_check
      _
    $region15: #{sam_neuro_2d_forward.1} parent=1 // pred_check_branch
      %27 = sbr.rel (0) target = $region17
    $region16: #{sam_neuro_2d_forward.1} parent=1 // pred_region
      _
    $region17: #{sam_neuro_2d_forward.1} parent=1 // pred_fallthru
      _
    // Predicated region
    $region18: #{sam_neuro_2d_forward.1} parent=1 // pred_check
      _
    $region19: #{sam_neuro_2d_forward.1} parent=1 // pred_check_branch
      %29 = sbr.rel (0) target = $region21
    $region20: #{sam_neuro_2d_forward.1} parent=1 // pred_region
      %30 = dma.done [#allocation3], 5120
    $region21: #{sam_neuro_2d_forward.1} parent=1 // pred_fallthru
      _
    %v32 = vld [vmem:[%s0] sm:$0xff]
    %v33 = vld [vmem:[%s0 + $0x8] sm:$0xff]
    %v34 = vld [vmem:[%s0 + $0x10] sm:$0xff]
    %v35 = vld [vmem:[%s0 + $0x18] sm:$0xff]
    %v36 = vld [vmem:[%s0 + $0x20] sm:$0xff]
    %v37 = vld [vmem:[%s0 + $0x28] sm:$0xff]
    %v38 = vld [vmem:[#allocation2] sm:$0xf]
    %v39 = vld [vmem:[#allocation2 + $0x4] sm:$0xf]
    %v40 = vld [vmem:[#allocation2 + $0x8] sm:$0xf]
    %v41 = vld [vmem:[#allocation2 + $0xc] sm:$0xf]
    %v42 = vld [vmem:[#allocation2 + $0x10] sm:$0xf]
    %v43 = vld [vmem:[#allocation2 + $0x14] sm:$0xf]
    %v44 = vld [vmem:[#allocation2 + $0x18] sm:$0xf]
    %v45 = vld [vmem:[#allocation2 + $0x1c] sm:$0xf]
    %v46 = vld [vmem:[#allocation2 + $0x20] sm:$0xf]
    %v47 = vld [vmem:[#allocation2 + $0x24] sm:$0xf]
    %v48 = vld [vmem:[#allocation2 + $0x28] sm:$0xf]
    %v49 = vld [vmem:[#allocation2 + $0x2c] sm:$0xf]
    %v50 = vld [vmem:[#allocation2 + $0x30] sm:$0xf]
    %v51 = vld [vmem:[#allocation2 + $0x34] sm:$0xf]
    %v52 = vld [vmem:[#allocation2 + $0x38] sm:$0xf]
    %v53 = vld [vmem:[#allocation2 + $0x3c] sm:$0xf]
    %v54 = vld [vmem:[#allocation2 + $0x40] sm:$0xf]
    %v55 = vld [vmem:[#allocation2 + $0x44] sm:$0xf]
    %v56 = vld [vmem:[#allocation2 + $0x48] sm:$0xf]
    %v57 = vld [vmem:[#allocation2 + $0x4c] sm:$0xf]
    %v58 = vld [vmem:[#allocation2 + $0x50] sm:$0xf]
    %v59 = vld [vmem:[#allocation2 + $0x54] sm:$0xf]
    %v60 = vld [vmem:[#allocation2 + $0x58] sm:$0xf]
    %v61 = vld [vmem:[#allocation2 + $0x5c] sm:$0xf]
    %v62 = vld [vmem:[#allocation2 + $0x60] sm:$0xf]
    %v63 = vld [vmem:[#allocation2 + $0x64] sm:$0xf]
    %v64 = vld [vmem:[#allocation2 + $0x68] sm:$0xf]
    %v65 = vld [vmem:[#allocation2 + $0x6c] sm:$0xf]
    %v66 = vld [vmem:[#allocation2 + $0x70] sm:$0xf]
    %v67 = vld [vmem:[#allocation2 + $0x74] sm:$0xf]
    %v68 = vld [vmem:[#allocation2 + $0x78] sm:$0xf]
    %v69 = vld [vmem:[#allocation2 + $0x7c] sm:$0xf]
    %v70 = vld [vmem:[#allocation2 + $0x80] sm:$0xf]
    %v71 = vld [vmem:[#allocation2 + $0x84] sm:$0xf]
    %v72 = vld [vmem:[#allocation2 + $0x88] sm:$0xf]
    %v73 = vld [vmem:[#allocation2 + $0x8c] sm:$0xf]
    %v74 = vld [vmem:[#allocation2 + $0x90] sm:$0xf]
    %v75 = vld [vmem:[#allocation2 + $0x94] sm:$0xf]
    %v76 = vld [vmem:[#allocation2 + $0x98] sm:$0xf]
    %v77 = vld [vmem:[#allocation2 + $0x9c] sm:$0xf]
    %v78 = vld [vmem:[#allocation2 + $0xa0] sm:$0xf]
    %v79 = vld [vmem:[#allocation2 + $0xa4] sm:$0xf]
    %v80 = vld [vmem:[#allocation2 + $0xa8] sm:$0xf]
    %v81 = vld [vmem:[#allocation2 + $0xac] sm:$0xf]
    %v82 = vld [vmem:[#allocation2 + $0xb0] sm:$0xf]
    %v83 = vld [vmem:[#allocation2 + $0xb4] sm:$0xf]
    %v84 = vld [vmem:[#allocation2 + $0xb8] sm:$0xf]
    %v85 = vld [vmem:[#allocation2 + $0xbc] sm:$0xf]
    %v86 = vld [vmem:[#allocation2 + $0xc0] sm:$0xf]
    %v87 = vld [vmem:[#allocation2 + $0xc4] sm:$0xf]
    %v88 = vld [vmem:[#allocation2 + $0xc8] sm:$0xf]
    %v89 = vld [vmem:[#allocation2 + $0xcc] sm:$0xf]
    %v90 = vld [vmem:[#allocation2 + $0xd0] sm:$0xf]
    %v91 = vld [vmem:[#allocation2 + $0xd4] sm:$0xf]
    %v92 = vld [vmem:[#allocation2 + $0xd8] sm:$0xf]
    %v93 = vld [vmem:[#allocation2 + $0xdc] sm:$0xf]
    %v94 = vld [vmem:[#allocation2 + $0xe0] sm:$0xf]
    %v95 = vld [vmem:[#allocation2 + $0xe4] sm:$0xf]
    %v96 = vld [vmem:[#allocation2 + $0xe8] sm:$0xf]
    %v97 = vld [vmem:[#allocation2 + $0xec] sm:$0xf]
    %v98 = vld [vmem:[#allocation2 + $0xf0] sm:$0xf]
    %v99 = vld [vmem:[#allocation2 + $0xf4] sm:$0xf]
    %v100 = vld [vmem:[#allocation2 + $0xf8] sm:$0xf]
    %v101 = vld [vmem:[#allocation2 + $0xfc] sm:$0xf]
    %v102 = vld [vmem:[#allocation2 + $0x100] sm:$0xf]
    %v103 = vld [vmem:[#allocation2 + $0x104] sm:$0xf]
    %v104 = vld [vmem:[#allocation2 + $0x108] sm:$0xf]
    %v105 = vld [vmem:[#allocation2 + $0x10c] sm:$0xf]
    %v106 = vld [vmem:[#allocation2 + $0x110] sm:$0xf]
    %v107 = vld [vmem:[#allocation2 + $0x114] sm:$0xf]
    %v108 = vld [vmem:[#allocation2 + $0x118] sm:$0xf]
    %v109 = vld [vmem:[#allocation2 + $0x11c] sm:$0xf]
    %v110 = vld [vmem:[#allocation2 + $0x120] sm:$0xf]
    %v111 = vld [vmem:[#allocation2 + $0x124] sm:$0xf]
    %v112 = vld [vmem:[#allocation2 + $0x128] sm:$0xf]
    %v113 = vld [vmem:[#allocation2 + $0x12c] sm:$0xf]
    %v114 = vld [vmem:[#allocation2 + $0x130] sm:$0xf]
    %v115 = vld [vmem:[#allocation2 + $0x134] sm:$0xf]
    %v116 = vld [vmem:[#allocation2 + $0x138] sm:$0xf]
    %v117 = vld [vmem:[#allocation2 + $0x13c] sm:$0xf]
    %v118 = vpack.c.bf16 %v33, %v32
    %v119 = vlaneseq
    %v120 = vshrl.u32 %v119, 7
    %v121 = vsub.s32 0, %v120
    %v122 = vrot.slane %v37, %v121
    %v139 = vunpack.c.l.b16 %v38
    %v140 = vunpack.c.l.b16 %v39
    %v141 = vunpack.c.l.b16 %v40
    %v142 = vunpack.c.l.b16 %v41
    %v143 = vunpack.c.l.b16 %v42
    %v144 = vunpack.c.l.b16 %v43
    %v145 = vunpack.c.l.b16 %v44
    %v146 = vunpack.c.l.b16 %v45
    %v147 = vunpack.c.l.b16 %v46
    %v148 = vunpack.c.l.b16 %v47
    %v149 = vunpack.c.l.b16 %v48
    %v150 = vunpack.c.l.b16 %v49
    %v151 = vunpack.c.l.b16 %v50
    %v152 = vunpack.c.l.b16 %v51
    %v153 = vunpack.c.l.b16 %v52
    %v154 = vunpack.c.l.b16 %v53
    %v155 = vpack.c.b16 %v140, %v139
    %v156 = vpack.c.b16 %v142, %v141
    %v157 = vpack.c.b16 %v144, %v143
    %v158 = vpack.c.b16 %v146, %v145
    %v159 = vpack.c.b16 %v148, %v147
    %v160 = vpack.c.b16 %v150, %v149
    %v161 = vpack.c.b16 %v152, %v151
    %v162 = vpack.c.b16 %v154, %v153
    %171 = vmatprep.subr.bf16.mxu0 0
    %172 = vmatpush1.bf16.msra.mxu0 %v155
    %173 = vmatprep.subr.bf16.mxu0 0
    %174 = vmatpush1.bf16.msra.mxu0 %v156
    %175 = vmatprep.subr.bf16.mxu0 0
    %176 = vmatpush1.bf16.msra.mxu0 %v157
    %177 = vmatprep.subr.bf16.mxu0 0
    %178 = vmatpush1.bf16.msra.mxu0 %v158
    %179 = vmatprep.subr.bf16.mxu0 0
    %180 = vmatpush1.bf16.msra.mxu0 %v159
    %181 = vmatprep.subr.bf16.mxu0 0
    %182 = vmatpush1.bf16.msra.mxu0 %v160
    %183 = vmatprep.subr.bf16.mxu0 0
    %184 = vmatpush1.bf16.msra.mxu0 %v161
    %185 = vmatprep.subr.bf16.mxu0 0
    %186 = vmatpush1.bf16.msra.mxu0 %v162
    %187 = vmatprep.subr.bf16.mxu0 0
    %188 = vmatpush1.bf16.msra.mxu0 0
    %189 = vmatprep.subr.bf16.mxu0 0
    %190 = vmatpush1.bf16.msra.mxu0 0
    %191 = vmatprep.subr.bf16.mxu0 0
    %192 = vmatpush1.bf16.msra.mxu0 0
    %193 = vmatprep.subr.bf16.mxu0 0
    %194 = vmatpush1.bf16.msra.mxu0 0
    %195 = vmatprep.subr.bf16.mxu0 0
    %196 = vmatpush1.bf16.msra.mxu0 0
    %197 = vmatprep.subr.bf16.mxu0 0
    %198 = vmatpush1.bf16.msra.mxu0 0
    %199 = vmatprep.subr.bf16.mxu0 0
    %200 = vmatpush1.bf16.msra.mxu0 0
    %201 = vmatprep.subr.bf16.mxu0 0
    %202 = vmatpush1.bf16.msra.mxu0 0
    %203 = vmatprep.mubr.bf16.mxu0 0
    %204 = vmatmul.mubr.bf16.gmra.mrb[0].mxu0 %v118
    %v205 = vpop.f32.mrb[0].mxu0
    %v206 = vadd.f32 %v122, %v205
    %v207 = vpop.f32.mrb[0].mxu0
    %v208 = vpop.f32.mrb[0].mxu0
    %v209 = vadd.f32 %v122, %v208
    %v210 = vpop.f32.mrb[0].mxu0
    %211 = vdwg.mxu0
    %v212 = vadd.f32 %v206, %v35
    %v213 = vadd.f32 %v209, %v36
    %214 = vadd.xlane.f32.xlu0 %v212
    %v215 = vpop.xlane.xlu0 %214
    %216 = vadd.xlane.f32.xlu0 %v213
    %v217 = vpop.xlane.xlu0 %216
    %v218 = vrcp.pop 128.0
    %v219 = vmul.f32 %v215, %v218
    %v220 = vmul.f32 %v217, %v218
    %v221 = vsub.f32 %v212, %v219
    %v222 = vsub.f32 %v213, %v220
    %v223 = vmul.f32 %v221, %v221
    %v224 = vmul.f32 %v222, %v222
    %225 = vadd.xlane.f32.xlu0 %v223
    %v226 = vpop.xlane.xlu0 %225
    %227 = vadd.xlane.f32.xlu0 %v224
    %v228 = vpop.xlane.xlu0 %227
    %v229 = vmul.f32 %v226, %v218
    %v230 = vmul.f32 %v228, %v218
    %v231 = vadd.f32 %v229, 1e-06
    %v232 = vadd.f32 %v230, 1e-06
    %v233 = vrsqrt.pop %v231
    %v234 = vrsqrt.pop %v232
    %v235 = vmul.f32 %v221, %v233
    %v236 = vmul.f32 %v222, %v234
    %v237 = vlaneseq
    %v238 = vshrl.u32 %v237, 7
    %v239 = vsub.s32 1, %v238
    %v240 = vrot.slane %v37, %v239
    %v241 = vmul.f32 %v235, %v240
    %v242 = vmul.f32 %v236, %v240
    %v243 = vlaneseq
    %v244 = vshrl.u32 %v243, 7
    %v245 = vsub.s32 2, %v244
    %v246 = vrot.slane %v37, %v245
    %v247 = vadd.f32 %v241, %v246
    %v248 = vadd.f32 %v242, %v246
    %v249 = vld [vmem:[%s2] sm:$0xff]
    %v250 = vld [vmem:[%s2 + $0x8] sm:$0xf]
    %v251 = vld [vmem:[%s2 + $0xc] sm:$0xff]
    %v252 = vld [vmem:[%s2 + $0x14] sm:$0xf]
    %v253 = vld [vmem:[%s2 + $0x18] sm:$0xff]
    %v254 = vld [vmem:[%s2 + $0x20] sm:$0xf]
    %v255 = vld [vmem:[%s2 + $0x24] sm:$0xff]
    %v256 = vld [vmem:[%s2 + $0x2c] sm:$0xf]
    %v257 = vld [vmem:[%s2 + $0x30] sm:$0xff]
    %v258 = vld [vmem:[%s2 + $0x38] sm:$0xf]
    %v259 = vld [vmem:[%s2 + $0x3c] sm:$0xff]
    %v260 = vld [vmem:[%s2 + $0x44] sm:$0xf]
    %v261 = vld [vmem:[%s2 + $0x48] sm:$0xff]
    %v262 = vld [vmem:[%s2 + $0x50] sm:$0xf]
    %v263 = vld [vmem:[%s2 + $0x54] sm:$0xff]
    %v264 = vld [vmem:[%s2 + $0x5c] sm:$0xf]
    %v265 = vld [vmem:[%s2 + $0x60] sm:$0xff]
    %v266 = vld [vmem:[%s2 + $0x68] sm:$0xf]
    %v267 = vld [vmem:[%s2 + $0x6c] sm:$0xff]
    %v268 = vld [vmem:[%s2 + $0x74] sm:$0xf]
    %v269 = vld [vmem:[%s2 + $0x78] sm:$0xff]
    %v270 = vld [vmem:[%s2 + $0x80] sm:$0xf]
    %v271 = vld [vmem:[%s2 + $0x84] sm:$0xff]
    %v272 = vld [vmem:[%s2 + $0x8c] sm:$0xf]
    %v273 = vld [vmem:[%s2 + $0x90] sm:$0xff]
    %v274 = vld [vmem:[%s2 + $0x98] sm:$0xf]
    %v275 = vld [vmem:[%s2 + $0x9c] sm:$0xff]
    %v276 = vld [vmem:[%s2 + $0xa4] sm:$0xf]
    %v277 = vld [vmem:[%s2 + $0xa8] sm:$0xff]
    %v278 = vld [vmem:[%s2 + $0xb0] sm:$0xf]
    %v279 = vld [vmem:[%s2 + $0xb4] sm:$0xff]
    %v280 = vld [vmem:[%s2 + $0xbc] sm:$0xf]
    %v281 = vpack.c.bf16 %v248, %v247
    %v314 = vunpack.c.l.b16 %v249
    %v315 = vunpack.c.h.b16 %v249
    %v316 = vunpack.c.l.b16 %v250
    %v317 = vunpack.c.l.b16 %v251
    %v318 = vunpack.c.h.b16 %v251
    %v319 = vunpack.c.l.b16 %v252
    %v320 = vunpack.c.l.b16 %v253
    %v321 = vunpack.c.h.b16 %v253
    %v322 = vunpack.c.l.b16 %v254
    %v323 = vunpack.c.l.b16 %v255
    %v324 = vunpack.c.h.b16 %v255
    %v325 = vunpack.c.l.b16 %v256
    %v326 = vunpack.c.l.b16 %v257
    %v327 = vunpack.c.h.b16 %v257
    %v328 = vunpack.c.l.b16 %v258
    %v329 = vunpack.c.l.b16 %v259
    %v330 = vunpack.c.h.b16 %v259
    %v331 = vunpack.c.l.b16 %v260
    %v332 = vunpack.c.l.b16 %v261
    %v333 = vunpack.c.h.b16 %v261
    %v334 = vunpack.c.l.b16 %v262
    %v335 = vunpack.c.l.b16 %v263
    %v336 = vunpack.c.h.b16 %v263
    %v337 = vunpack.c.l.b16 %v264
    %v338 = vunpack.c.l.b16 %v265
    %v339 = vunpack.c.h.b16 %v265
    %v340 = vunpack.c.l.b16 %v266
    %v341 = vunpack.c.l.b16 %v267
    %v342 = vunpack.c.h.b16 %v267
    %v343 = vunpack.c.l.b16 %v268
    %v344 = vunpack.c.l.b16 %v269
    %v345 = vunpack.c.h.b16 %v269
    %v346 = vunpack.c.l.b16 %v270
    %v347 = vunpack.c.l.b16 %v271
    %v348 = vunpack.c.h.b16 %v271
    %v349 = vunpack.c.l.b16 %v272
    %v350 = vunpack.c.l.b16 %v273
    %v351 = vunpack.c.h.b16 %v273
    %v352 = vunpack.c.l.b16 %v274
    %v353 = vunpack.c.l.b16 %v275
    %v354 = vunpack.c.h.b16 %v275
    %v355 = vunpack.c.l.b16 %v276
    %v356 = vunpack.c.l.b16 %v277
    %v357 = vunpack.c.h.b16 %v277
    %v358 = vunpack.c.l.b16 %v278
    %v359 = vunpack.c.l.b16 %v279
    %v360 = vunpack.c.h.b16 %v279
    %v361 = vunpack.c.l.b16 %v280
    %v362 = vpack.c.b16 %v317, %v314
    %v363 = vpack.c.b16 %v318, %v315
    %v364 = vpack.c.b16 %v319, %v316
    %v365 = vpack.c.b16 %v323, %v320
    %v366 = vpack.c.b16 %v324, %v321
    %v367 = vpack.c.b16 %v325, %v322
    %v368 = vpack.c.b16 %v329, %v326
    %v369 = vpack.c.b16 %v330, %v327
    %v370 = vpack.c.b16 %v331, %v328
    %v371 = vpack.c.b16 %v335, %v332
    %v372 = vpack.c.b16 %v336, %v333
    %v373 = vpack.c.b16 %v337, %v334
    %v374 = vpack.c.b16 %v341, %v338
    %v375 = vpack.c.b16 %v342, %v339
    %v376 = vpack.c.b16 %v343, %v340
    %v377 = vpack.c.b16 %v347, %v344
    %v378 = vpack.c.b16 %v348, %v345
    %v379 = vpack.c.b16 %v349, %v346
    %v380 = vpack.c.b16 %v353, %v350
    %v381 = vpack.c.b16 %v354, %v351
    %v382 = vpack.c.b16 %v355, %v352
    %v383 = vpack.c.b16 %v359, %v356
    %v384 = vpack.c.b16 %v360, %v357
    %v385 = vpack.c.b16 %v361, %v358
    %410 = vmatprep.subr.bf16.mxu0 %v363
    %411 = vmatpush1.bf16.msra.mxu0 %v362
    %412 = vmatprep.subr.bf16.mxu0 %v366
    %413 = vmatpush1.bf16.msra.mxu0 %v365
    %414 = vmatprep.subr.bf16.mxu0 %v369
    %415 = vmatpush1.bf16.msra.mxu0 %v368
    %416 = vmatprep.subr.bf16.mxu0 %v372
    %417 = vmatpush1.bf16.msra.mxu0 %v371
    %418 = vmatprep.subr.bf16.mxu0 %v375
    %419 = vmatpush1.bf16.msra.mxu0 %v374
    %420 = vmatprep.subr.bf16.mxu0 %v378
    %421 = vmatpush1.bf16.msra.mxu0 %v377
    %422 = vmatprep.subr.bf16.mxu0 %v381
    %423 = vmatpush1.bf16.msra.mxu0 %v380
    %424 = vmatprep.subr.bf16.mxu0 %v384
    %425 = vmatpush1.bf16.msra.mxu0 %v383
    %426 = vmatprep.subr.bf16.mxu0 0
    %427 = vmatpush1.bf16.msra.mxu0 0
    %428 = vmatprep.subr.bf16.mxu0 0
    %429 = vmatpush1.bf16.msra.mxu0 0
    %430 = vmatprep.subr.bf16.mxu0 0
    %431 = vmatpush1.bf16.msra.mxu0 0
    %432 = vmatprep.subr.bf16.mxu0 0
    %433 = vmatpush1.bf16.msra.mxu0 0
    %434 = vmatprep.subr.bf16.mxu0 0
    %435 = vmatpush1.bf16.msra.mxu0 0
    %436 = vmatprep.subr.bf16.mxu0 0
    %437 = vmatpush1.bf16.msra.mxu0 0
    %438 = vmatprep.subr.bf16.mxu0 0
    %439 = vmatpush1.bf16.msra.mxu0 0
    %440 = vmatprep.subr.bf16.mxu0 0
    %441 = vmatpush1.bf16.msra.mxu0 0
    %442 = vmatprep.mubr.bf16.mxu0 0
    %443 = vmatmul.mubr.bf16.gmra.mrb[0].mxu0 %v281
    %v444 = vpop.f32.mrb[0].mxu0
    %v445 = vadd.f32 0.0, %v444
    %v446 = vpop.f32.mrb[0].mxu0
    %v447 = vadd.f32 0.0, %v446
    %v448 = vpop.f32.mrb[0].mxu0
    %v449 = vadd.f32 0.0, %v448
    %v450 = vpop.f32.mrb[0].mxu0
    %v451 = vadd.f32 0.0, %v450
    %452 = vdwg.mxu0
    %453 = vmatprep.subr.bf16.mxu0 0
    %454 = vmatpush1.bf16.msra.mxu0 %v364
    %455 = vmatprep.subr.bf16.mxu0 0
    %456 = vmatpush1.bf16.msra.mxu0 %v367
    %457 = vmatprep.subr.bf16.mxu0 0
    %458 = vmatpush1.bf16.msra.mxu0 %v370
    %459 = vmatprep.subr.bf16.mxu0 0
    %460 = vmatpush1.bf16.msra.mxu0 %v373
    %461 = vmatprep.subr.bf16.mxu0 0
    %462 = vmatpush1.bf16.msra.mxu0 %v376
    %463 = vmatprep.subr.bf16.mxu0 0
    %464 = vmatpush1.bf16.msra.mxu0 %v379
    %465 = vmatprep.subr.bf16.mxu0 0
    %466 = vmatpush1.bf16.msra.mxu0 %v382
    %467 = vmatprep.subr.bf16.mxu0 0
    %468 = vmatpush1.bf16.msra.mxu0 %v385
    %469 = vmatprep.subr.bf16.mxu0 0
    %470 = vmatpush1.bf16.msra.mxu0 0
    %471 = vmatprep.subr.bf16.mxu0 0
    %472 = vmatpush1.bf16.msra.mxu0 0
    %473 = vmatprep.subr.bf16.mxu0 0
    %474 = vmatpush1.bf16.msra.mxu0 0
    %475 = vmatprep.subr.bf16.mxu0 0
    %476 = vmatpush1.bf16.msra.mxu0 0
    %477 = vmatprep.subr.bf16.mxu0 0
    %478 = vmatpush1.bf16.msra.mxu0 0
    %479 = vmatprep.subr.bf16.mxu0 0
    %480 = vmatpush1.bf16.msra.mxu0 0
    %481 = vmatprep.subr.bf16.mxu0 0
    %482 = vmatpush1.bf16.msra.mxu0 0
    %483 = vmatprep.subr.bf16.mxu0 0
    %484 = vmatpush1.bf16.msra.mxu0 0
    %485 = vmatprep.mubr.bf16.mxu0 0
    %486 = vmatmul.mubr.bf16.gmra.mrb[0].mxu0 %v281
    %v487 = vpop.f32.mrb[0].mxu0
    %v488 = vadd.f32 0.0, %v487
    %v489 = vpop.f32.mrb[0].mxu0
    %v490 = vpop.f32.mrb[0].mxu0
    %v491 = vadd.f32 0.0, %v490
    %v492 = vpop.f32.mrb[0].mxu0
    %493 = vdwg.mxu0
    %v494 = vpack.c.bf16 %v449, %v445
    %v495 = vpack.c.bf16 %v451, %v447
    %496 = vmatprep.subr.bf16.mxu0 0
    %497 = vmatpush1.bf16.xpose.msra.mxu0 %v495
    %498 = vmatprep.subr.bf16.mxu0 0
    %499 = vmatpush1.bf16.xpose.msra.mxu0 0
    %500 = vmatprep.subr.bf16.mxu0 0
    %501 = vmatpush1.bf16.xpose.msra.mxu0 0
    %502 = vmatprep.subr.bf16.mxu0 0
    %503 = vmatpush1.bf16.xpose.msra.mxu0 0
    %504 = vmatprep.subr.bf16.mxu0 0
    %505 = vmatpush1.bf16.xpose.msra.mxu0 0
    %506 = vmatprep.subr.bf16.mxu0 0
    %507 = vmatpush1.bf16.xpose.msra.mxu0 0
    %508 = vmatprep.subr.bf16.mxu0 0
    %509 = vmatpush1.bf16.xpose.msra.mxu0 0
    %510 = vmatprep.subr.bf16.mxu0 0
    %511 = vmatpush1.bf16.xpose.msra.mxu0 0
    %512 = vmatprep.subr.bf16.mxu0 0
    %513 = vmatpush1.bf16.xpose.msra.mxu0 0
    %514 = vmatprep.subr.bf16.mxu0 0
    %515 = vmatpush1.bf16.xpose.msra.mxu0 0
    %516 = vmatprep.subr.bf16.mxu0 0
    %517 = vmatpush1.bf16.xpose.msra.mxu0 0
    %518 = vmatprep.subr.bf16.mxu0 0
    %519 = vmatpush1.bf16.xpose.msra.mxu0 0
    %520 = vmatprep.subr.bf16.mxu0 0
    %521 = vmatpush1.bf16.xpose.msra.mxu0 0
    %522 = vmatprep.subr.bf16.mxu0 0
    %523 = vmatpush1.bf16.xpose.msra.mxu0 0
    %524 = vmatprep.subr.bf16.mxu0 0
    %525 = vmatpush1.bf16.xpose.msra.mxu0 0
    %526 = vmatprep.subr.bf16.mxu0 0
    %527 = vmatpush1.bf16.xpose.msra.mxu0 0
    %528 = vmatprep.mubr.bf16.mxu0 0
    %529 = vmatmul.mubr.bf16.gmra.mrb[0].mxu0 %v494
    %v530 = vpop.f32.mrb[0].mxu0
    %v531 = vadd.f32 0.0, %v530
    %v532 = vpop.f32.mrb[0].mxu0
    %v533 = vpop.f32.mrb[0].mxu0
    %v534 = vadd.f32 0.0, %v533
    %v535 = vpop.f32.mrb[0].mxu0
    %536 = vdwg.mxu0
    %v537 = vmul.f32 %v531, 0.088388346
    %v538 = vmul.f32 %v534, 0.088388346
    %vm539 = vcmask 130048
    %v540 = vsel %vm539, %v537, -inf
    %541 = vmax.xlane.f32.xlu0 %v540
    %v542 = vpop.xlane.xlu0 %541
    %v543 = vsel %vm539, %v538, -inf
    %544 = vmax.xlane.f32.xlu0 %v543
    %v545 = vpop.xlane.xlu0 %544
    %v546 = vsub.f32 %v537, %v542
    %v547 = vsub.f32 %v538, %v545
    %v548 = vmul.f32 %v546, 1.442695
    %v549 = vpow.pop %v548
    %v550 = vmul.f32 %v547, 1.442695
    %v551 = vpow.pop %v550
    %v552 = vsel %vm539, %v549, 0.0
    %553 = vadd.xlane.f32.xlu0 %v552
    %v554 = vpop.xlane.xlu0 %553
    %v555 = vsel %vm539, %v551, 0.0
    %556 = vadd.xlane.f32.xlu0 %v555
    %v557 = vpop.xlane.xlu0 %556
    %v558 = vrcp.pop %v554
    %v559 = vrcp.pop %v557
    %v560 = vmul.f32 %v549, %v558
    %v561 = vmul.f32 %v551, %v559
    %v562 = vpack.c.bf16 %v561, %v560
    %v563 = vpack.c.bf16 %v491, %v488
    %v565 = vsel %vm539, %v562, 0
    %567 = vmatprep.subr.bf16.mxu0 0
    %568 = vmatpush1.bf16.msra.mxu0 %v563
    %569 = vmatprep.subr.bf16.mxu0 0
    %570 = vmatpush1.bf16.msra.mxu0 0
    %571 = vmatprep.subr.bf16.mxu0 0
    %572 = vmatpush1.bf16.msra.mxu0 0
    %573 = vmatprep.subr.bf16.mxu0 0
    %574 = vmatpush1.bf16.msra.mxu0 0
    %575 = vmatprep.subr.bf16.mxu0 0
    %576 = vmatpush1.bf16.msra.mxu0 0
    %577 = vmatprep.subr.bf16.mxu0 0
    %578 = vmatpush1.bf16.msra.mxu0 0
    %579 = vmatprep.subr.bf16.mxu0 0
    %580 = vmatpush1.bf16.msra.mxu0 0
    %581 = vmatprep.subr.bf16.mxu0 0
    %582 = vmatpush1.bf16.msra.mxu0 0
    %583 = vmatprep.subr.bf16.mxu0 0
    %584 = vmatpush1.bf16.msra.mxu0 0
    %585 = vmatprep.subr.bf16.mxu0 0
    %586 = vmatpush1.bf16.msra.mxu0 0
    %587 = vmatprep.subr.bf16.mxu0 0
    %588 = vmatpush1.bf16.msra.mxu0 0
    %589 = vmatprep.subr.bf16.mxu0 0
    %590 = vmatpush1.bf16.msra.mxu0 0
    %591 = vmatprep.subr.bf16.mxu0 0
    %592 = vmatpush1.bf16.msra.mxu0 0
    %593 = vmatprep.subr.bf16.mxu0 0
    %594 = vmatpush1.bf16.msra.mxu0 0
    %595 = vmatprep.subr.bf16.mxu0 0
    %596 = vmatpush1.bf16.msra.mxu0 0
    %597 = vmatprep.subr.bf16.mxu0 0
    %598 = vmatpush1.bf16.msra.mxu0 0
    %599 = vmatprep.mubr.bf16.mxu0 0
    %600 = vmatmul.mubr.bf16.gmra.mrb[0].mxu0 %v565
    %v601 = vpop.f32.mrb[0].mxu0
    %v602 = vadd.f32 0.0, %v601
    %v603 = vpop.f32.mrb[0].mxu0
    %v604 = vpop.f32.mrb[0].mxu0
    %v605 = vadd.f32 0.0, %v604
    %v606 = vpop.f32.mrb[0].mxu0
    %607 = vdwg.mxu0
    %v608 = vpack.c.bf16 %v605, %v602
    %v625 = vunpack.c.l.b16 %v54
    %v626 = vunpack.c.l.b16 %v55
    %v627 = vunpack.c.l.b16 %v56
    %v628 = vunpack.c.l.b16 %v57
    %v629 = vunpack.c.l.b16 %v58
    %v630 = vunpack.c.l.b16 %v59
    %v631 = vunpack.c.l.b16 %v60
    %v632 = vunpack.c.l.b16 %v61
    %v633 = vunpack.c.l.b16 %v62
    %v634 = vunpack.c.l.b16 %v63
    %v635 = vunpack.c.l.b16 %v64
    %v636 = vunpack.c.l.b16 %v65
    %v637 = vunpack.c.l.b16 %v66
    %v638 = vunpack.c.l.b16 %v67
    %v639 = vunpack.c.l.b16 %v68
    %v640 = vunpack.c.l.b16 %v69
    %v641 = vpack.c.b16 %v626, %v625
    %v642 = vpack.c.b16 %v628, %v627
    %v643 = vpack.c.b16 %v630, %v629
    %v644 = vpack.c.b16 %v632, %v631
    %v645 = vpack.c.b16 %v634, %v633
    %v646 = vpack.c.b16 %v636, %v635
    %v647 = vpack.c.b16 %v638, %v637
    %v648 = vpack.c.b16 %v640, %v639
    %657 = vmatprep.subr.bf16.mxu0 0
    %658 = vmatpush1.bf16.msra.mxu0 %v641
    %659 = vmatprep.subr.bf16.mxu0 0
    %660 = vmatpush1.bf16.msra.mxu0 %v642
    %661 = vmatprep.subr.bf16.mxu0 0
    %662 = vmatpush1.bf16.msra.mxu0 %v643
    %663 = vmatprep.subr.bf16.mxu0 0
    %664 = vmatpush1.bf16.msra.mxu0 %v644
    %665 = vmatprep.subr.bf16.mxu0 0
    %666 = vmatpush1.bf16.msra.mxu0 %v645
    %667 = vmatprep.subr.bf16.mxu0 0
    %668 = vmatpush1.bf16.msra.mxu0 %v646
    %669 = vmatprep.subr.bf16.mxu0 0
    %670 = vmatpush1.bf16.msra.mxu0 %v647
    %671 = vmatprep.subr.bf16.mxu0 0
    %672 = vmatpush1.bf16.msra.mxu0 %v648
    %673 = vmatprep.subr.bf16.mxu0 0
    %674 = vmatpush1.bf16.msra.mxu0 0
    %675 = vmatprep.subr.bf16.mxu0 0
    %676 = vmatpush1.bf16.msra.mxu0 0
    %677 = vmatprep.subr.bf16.mxu0 0
    %678 = vmatpush1.bf16.msra.mxu0 0
    %679 = vmatprep.subr.bf16.mxu0 0
    %680 = vmatpush1.bf16.msra.mxu0 0
    %681 = vmatprep.subr.bf16.mxu0 0
    %682 = vmatpush1.bf16.msra.mxu0 0
    %683 = vmatprep.subr.bf16.mxu0 0
    %684 = vmatpush1.bf16.msra.mxu0 0
    %685 = vmatprep.subr.bf16.mxu0 0
    %686 = vmatpush1.bf16.msra.mxu0 0
    %687 = vmatprep.subr.bf16.mxu0 0
    %688 = vmatpush1.bf16.msra.mxu0 0
    %689 = vmatprep.mubr.bf16.mxu0 0
    %690 = vmatmul.mubr.bf16.gmra.mrb[0].mxu0 %v608
    %v691 = vpop.f32.mrb[0].mxu0
    %v692 = vadd.f32 0.0, %v691
    %v693 = vpop.f32.mrb[0].mxu0
    %v694 = vpop.f32.mrb[0].mxu0
    %v695 = vadd.f32 0.0, %v694
    %v696 = vpop.f32.mrb[0].mxu0
    %697 = vdwg.mxu0
    %v698 = vadd.f32 %v212, %v692
    %v699 = vadd.f32 %v213, %v695
    %700 = vadd.xlane.f32.xlu0 %v698
    %v701 = vpop.xlane.xlu0 %700
    %702 = vadd.xlane.f32.xlu0 %v699
    %v703 = vpop.xlane.xlu0 %702
    %v704 = vmul.f32 %v701, %v218
    %v705 = vmul.f32 %v703, %v218
    %v706 = vsub.f32 %v698, %v704
    %v707 = vsub.f32 %v699, %v705
    %v708 = vmul.f32 %v706, %v706
    %v709 = vmul.f32 %v707, %v707
    %710 = vadd.xlane.f32.xlu0 %v708
    %v711 = vpop.xlane.xlu0 %710
    %712 = vadd.xlane.f32.xlu0 %v709
    %v713 = vpop.xlane.xlu0 %712
    %v714 = vmul.f32 %v711, %v218
    %v715 = vmul.f32 %v713, %v218
    %v716 = vadd.f32 %v714, 1e-06
    %v717 = vadd.f32 %v715, 1e-06
    %v718 = vrsqrt.pop %v716
    %v719 = vrsqrt.pop %v717
    %v720 = vmul.f32 %v706, %v718
    %v721 = vmul.f32 %v707, %v719
    %v722 = vlaneseq
    %v723 = vshrl.u32 %v722, 7
    %v724 = vsub.s32 3, %v723
    %v725 = vrot.slane %v37, %v724
    %v726 = vmul.f32 %v720, %v725
    %v727 = vmul.f32 %v721, %v725
    %v728 = vlaneseq
    %v729 = vshrl.u32 %v728, 7
    %v730 = vsub.s32 4, %v729
    %v731 = vrot.slane %v37, %v730
    %v732 = vadd.f32 %v726, %v731
    %v733 = vadd.f32 %v727, %v731
    %v734 = vld [vmem:[%s3] sm:$0xff]
    %v735 = vld [vmem:[%s3 + $0x8] sm:$0xff]
    %v736 = vld [vmem:[%s3 + $0x10] sm:$0xff]
    %v737 = vld [vmem:[%s3 + $0x18] sm:$0xff]
    %v738 = vld [vmem:[%s3 + $0x20] sm:$0xff]
    %v739 = vld [vmem:[%s3 + $0x28] sm:$0xff]
    %v740 = vld [vmem:[%s3 + $0x30] sm:$0xff]
    %v741 = vld [vmem:[%s3 + $0x38] sm:$0xff]
    %v742 = vld [vmem:[%s3 + $0x40] sm:$0xff]
    %v743 = vld [vmem:[%s3 + $0x48] sm:$0xff]
    %v744 = vld [vmem:[%s3 + $0x50] sm:$0xff]
    %v745 = vld [vmem:[%s3 + $0x58] sm:$0xff]
    %v746 = vld [vmem:[%s3 + $0x60] sm:$0xff]
    %v747 = vld [vmem:[%s3 + $0x68] sm:$0xff]
    %v748 = vld [vmem:[%s3 + $0x70] sm:$0xff]
    %v749 = vld [vmem:[%s3 + $0x78] sm:$0xff]
    %v750 = vpack.c.bf16 %v733, %v732
    %v767 = vunpack.c.l.b16 %v734
    %v768 = vunpack.c.h.b16 %v734
    %v769 = vunpack.c.l.b16 %v735
    %v770 = vunpack.c.h.b16 %v735
    %v771 = vunpack.c.l.b16 %v736
    %v772 = vunpack.c.h.b16 %v736
    %v773 = vunpack.c.l.b16 %v737
    %v774 = vunpack.c.h.b16 %v737
    %v775 = vunpack.c.l.b16 %v738
    %v776 = vunpack.c.h.b16 %v738
    %v777 = vunpack.c.l.b16 %v739
    %v778 = vunpack.c.h.b16 %v739
    %v779 = vunpack.c.l.b16 %v740
    %v780 = vunpack.c.h.b16 %v740
    %v781 = vunpack.c.l.b16 %v741
    %v782 = vunpack.c.h.b16 %v741
    %v783 = vunpack.c.l.b16 %v742
    %v784 = vunpack.c.h.b16 %v742
    %v785 = vunpack.c.l.b16 %v743
    %v786 = vunpack.c.h.b16 %v743
    %v787 = vunpack.c.l.b16 %v744
    %v788 = vunpack.c.h.b16 %v744
    %v789 = vunpack.c.l.b16 %v745
    %v790 = vunpack.c.h.b16 %v745
    %v791 = vunpack.c.l.b16 %v746
    %v792 = vunpack.c.h.b16 %v746
    %v793 = vunpack.c.l.b16 %v747
    %v794 = vunpack.c.h.b16 %v747
    %v795 = vunpack.c.l.b16 %v748
    %v796 = vunpack.c.h.b16 %v748
    %v797 = vunpack.c.l.b16 %v749
    %v798 = vunpack.c.h.b16 %v749
    %v799 = vpack.c.b16 %v769, %v767
    %v800 = vpack.c.b16 %v770, %v768
    %v801 = vpack.c.b16 %v773, %v771
    %v802 = vpack.c.b16 %v774, %v772
    %v803 = vpack.c.b16 %v777, %v775
    %v804 = vpack.c.b16 %v778, %v776
    %v805 = vpack.c.b16 %v781, %v779
    %v806 = vpack.c.b16 %v782, %v780
    %v807 = vpack.c.b16 %v785, %v783
    %v808 = vpack.c.b16 %v786, %v784
    %v809 = vpack.c.b16 %v789, %v787
    %v810 = vpack.c.b16 %v790, %v788
    %v811 = vpack.c.b16 %v793, %v791
    %v812 = vpack.c.b16 %v794, %v792
    %v813 = vpack.c.b16 %v797, %v795
    %v814 = vpack.c.b16 %v798, %v796
    %831 = vmatprep.subr.bf16.mxu0 %v800
    %832 = vmatpush1.bf16.msra.mxu0 %v799
    %833 = vmatprep.subr.bf16.mxu0 %v802
    %834 = vmatpush1.bf16.msra.mxu0 %v801
    %835 = vmatprep.subr.bf16.mxu0 %v804
    %836 = vmatpush1.bf16.msra.mxu0 %v803
    %837 = vmatprep.subr.bf16.mxu0 %v806
    %838 = vmatpush1.bf16.msra.mxu0 %v805
    %839 = vmatprep.subr.bf16.mxu0 %v808
    %840 = vmatpush1.bf16.msra.mxu0 %v807
    %841 = vmatprep.subr.bf16.mxu0 %v810
    %842 = vmatpush1.bf16.msra.mxu0 %v809
    %843 = vmatprep.subr.bf16.mxu0 %v812
    %844 = vmatpush1.bf16.msra.mxu0 %v811
    %845 = vmatprep.subr.bf16.mxu0 %v814
    %846 = vmatpush1.bf16.msra.mxu0 %v813
    %847 = vmatprep.subr.bf16.mxu0 0
    %848 = vmatpush1.bf16.msra.mxu0 0
    %849 = vmatprep.subr.bf16.mxu0 0
    %850 = vmatpush1.bf16.msra.mxu0 0
    %851 = vmatprep.subr.bf16.mxu0 0
    %852 = vmatpush1.bf16.msra.mxu0 0
    %853 = vmatprep.subr.bf16.mxu0 0
    %854 = vmatpush1.bf16.msra.mxu0 0
    %855 = vmatprep.subr.bf16.mxu0 0
    %856 = vmatpush1.bf16.msra.mxu0 0
    %857 = vmatprep.subr.bf16.mxu0 0
    %858 = vmatpush1.bf16.msra.mxu0 0
    %859 = vmatprep.subr.bf16.mxu0 0
    %860 = vmatpush1.bf16.msra.mxu0 0
    %861 = vmatprep.subr.bf16.mxu0 0
    %862 = vmatpush1.bf16.msra.mxu0 0
    %863 = vmatprep.mubr.bf16.mxu0 0
    %864 = vmatmul.mubr.bf16.gmra.mrb[0].mxu0 %v750
    %v865 = vpop.f32.mrb[0].mxu0
    %v866 = vadd.f32 0.0, %v865
    %v867 = vpop.f32.mrb[0].mxu0
    %v868 = vadd.f32 0.0, %v867
    %v869 = vpop.f32.mrb[0].mxu0
    %v870 = vadd.f32 0.0, %v869
    %v871 = vpop.f32.mrb[0].mxu0
    %v872 = vadd.f32 0.0, %v871
    %873 = vdwg.mxu0
    %v874 = vmul.f32 %v866, 0.5
    %v875 = vmul.f32 %v868, 0.5
    %v876 = vmul.f32 %v870, 0.5
    %v877 = vmul.f32 %v872, 0.5
    %v878 = vmul.f32 %v866, 0.044715
    %v879 = vmul.f32 %v868, 0.044715
    %v880 = vmul.f32 %v870, 0.044715
    %v881 = vmul.f32 %v872, 0.044715
    %v882 = vmul.f32 %v878, %v866
    %v883 = vmul.f32 %v879, %v868
    %v884 = vmul.f32 %v880, %v870
    %v885 = vmul.f32 %v881, %v872
    %v886 = vmul.f32 %v882, %v866
    %v887 = vmul.f32 %v883, %v868
    %v888 = vmul.f32 %v884, %v870
    %v889 = vmul.f32 %v885, %v872
    %v890 = vadd.f32 %v866, %v886
    %v891 = vadd.f32 %v868, %v887
    %v892 = vadd.f32 %v870, %v888
    %v893 = vadd.f32 %v872, %v889
    %v894 = vmul.f32 %v890, 0.7978846
    %v895 = vmul.f32 %v891, 0.7978846
    %v896 = vmul.f32 %v892, 0.7978846
    %v897 = vmul.f32 %v893, 0.7978846
    %v898 = vtanh.pop %v894
    %v899 = vtanh.pop %v895
    %v900 = vtanh.pop %v896
    %v901 = vtanh.pop %v897
    %v902 = vadd.f32 %v898, 1.0
    %v903 = vadd.f32 %v899, 1.0
    %v904 = vadd.f32 %v900, 1.0
    %v905 = vadd.f32 %v901, 1.0
    %v906 = vmul.f32 %v874, %v902
    %v907 = vmul.f32 %v875, %v903
    %v908 = vmul.f32 %v876, %v904
    %v909 = vmul.f32 %v877, %v905
    %v910 = vpack.c.bf16 %v908, %v906
    %v911 = vpack.c.bf16 %v909, %v907
    %v944 = vunpack.c.l.b16 %v86
    %v945 = vunpack.c.l.b16 %v87
    %v946 = vunpack.c.l.b16 %v88
    %v947 = vunpack.c.l.b16 %v89
    %v948 = vunpack.c.l.b16 %v90
    %v949 = vunpack.c.l.b16 %v91
    %v950 = vunpack.c.l.b16 %v92
    %v951 = vunpack.c.l.b16 %v93
    %v952 = vunpack.c.l.b16 %v94
    %v953 = vunpack.c.l.b16 %v95
    %v954 = vunpack.c.l.b16 %v96
    %v955 = vunpack.c.l.b16 %v97
    %v956 = vunpack.c.l.b16 %v98
    %v957 = vunpack.c.l.b16 %v99
    %v958 = vunpack.c.l.b16 %v100
    %v959 = vunpack.c.l.b16 %v101
    %v960 = vunpack.c.l.b16 %v102
    %v961 = vunpack.c.l.b16 %v103
    %v962 = vunpack.c.l.b16 %v104
    %v963 = vunpack.c.l.b16 %v105
    %v964 = vunpack.c.l.b16 %v106
    %v965 = vunpack.c.l.b16 %v107
    %v966 = vunpack.c.l.b16 %v108
    %v967 = vunpack.c.l.b16 %v109
    %v968 = vunpack.c.l.b16 %v110
    %v969 = vunpack.c.l.b16 %v111
    %v970 = vunpack.c.l.b16 %v112
    %v971 = vunpack.c.l.b16 %v113
    %v972 = vunpack.c.l.b16 %v114
    %v973 = vunpack.c.l.b16 %v115
    %v974 = vunpack.c.l.b16 %v116
    %v975 = vunpack.c.l.b16 %v117
    %v976 = vpack.c.b16 %v945, %v944
    %v977 = vpack.c.b16 %v947, %v946
    %v978 = vpack.c.b16 %v949, %v948
    %v979 = vpack.c.b16 %v951, %v950
    %v980 = vpack.c.b16 %v953, %v952
    %v981 = vpack.c.b16 %v955, %v954
    %v982 = vpack.c.b16 %v957, %v956
    %v983 = vpack.c.b16 %v959, %v958
    %v984 = vpack.c.b16 %v961, %v960
    %v985 = vpack.c.b16 %v963, %v962
    %v986 = vpack.c.b16 %v965, %v964
    %v987 = vpack.c.b16 %v967, %v966
    %v988 = vpack.c.b16 %v969, %v968
    %v989 = vpack.c.b16 %v971, %v970
    %v990 = vpack.c.b16 %v973, %v972
    %v991 = vpack.c.b16 %v975, %v974
    %1008 = vmatprep.subr.bf16.mxu0 0
    %1009 = vmatpush1.bf16.msra.mxu0 %v976
    %1010 = vmatprep.subr.bf16.mxu0 0
    %1011 = vmatpush1.bf16.msra.mxu0 %v977
    %1012 = vmatprep.subr.bf16.mxu0 0
    %1013 = vmatpush1.bf16.msra.mxu0 %v978
    %1014 = vmatprep.subr.bf16.mxu0 0
    %1015 = vmatpush1.bf16.msra.mxu0 %v979
    %1016 = vmatprep.subr.bf16.mxu0 0
    %1017 = vmatpush1.bf16.msra.mxu0 %v980
    %1018 = vmatprep.subr.bf16.mxu0 0
    %1019 = vmatpush1.bf16.msra.mxu0 %v981
    %1020 = vmatprep.subr.bf16.mxu0 0
    %1021 = vmatpush1.bf16.msra.mxu0 %v982
    %1022 = vmatprep.subr.bf16.mxu0 0
    %1023 = vmatpush1.bf16.msra.mxu0 %v983
    %1024 = vmatprep.subr.bf16.mxu0 0
    %1025 = vmatpush1.bf16.msra.mxu0 %v984
    %1026 = vmatprep.subr.bf16.mxu0 0
    %1027 = vmatpush1.bf16.msra.mxu0 %v985
    %1028 = vmatprep.subr.bf16.mxu0 0
    %1029 = vmatpush1.bf16.msra.mxu0 %v986
    %1030 = vmatprep.subr.bf16.mxu0 0
    %1031 = vmatpush1.bf16.msra.mxu0 %v987
    %1032 = vmatprep.subr.bf16.mxu0 0
    %1033 = vmatpush1.bf16.msra.mxu0 %v988
    %1034 = vmatprep.subr.bf16.mxu0 0
    %1035 = vmatpush1.bf16.msra.mxu0 %v989
    %1036 = vmatprep.subr.bf16.mxu0 0
    %1037 = vmatpush1.bf16.msra.mxu0 %v990
    %1038 = vmatprep.subr.bf16.mxu0 0
    %1039 = vmatpush1.bf16.msra.mxu0 %v991
    %1040 = vmatprep.mubr.bf16.mxu0 %v911
    %1041 = vmatmul.mubr.bf16.gmra.mrb[0].mxu0 %v910
    %v1042 = vpop.f32.mrb[0].mxu0
    %v1043 = vadd.f32 0.0, %v1042
    %v1044 = vpop.f32.mrb[0].mxu0
    %v1045 = vpop.f32.mrb[0].mxu0
    %v1046 = vadd.f32 0.0, %v1045
    %v1047 = vpop.f32.mrb[0].mxu0
    %1048 = vdwg.mxu0
    %v1049 = vadd.f32 %v698, %v1043
    %v1050 = vadd.f32 %v699, %v1046
    %s1051 = scalar_lea.vmem %s2, 192
    %v1052 = vld [vmem:[%s1051] sm:$0xff]
    %v1053 = vld [vmem:[%s1051 + $0x8] sm:$0xf]
    %v1054 = vld [vmem:[%s1051 + $0xc] sm:$0xff]
    %v1055 = vld [vmem:[%s1051 + $0x14] sm:$0xf]
    %v1056 = vld [vmem:[%s1051 + $0x18] sm:$0xff]
    %v1057 = vld [vmem:[%s1051 + $0x20] sm:$0xf]
    %v1058 = vld [vmem:[%s1051 + $0x24] sm:$0xff]
    %v1059 = vld [vmem:[%s1051 + $0x2c] sm:$0xf]
    %v1060 = vld [vmem:[%s1051 + $0x30] sm:$0xff]
    %v1061 = vld [vmem:[%s1051 + $0x38] sm:$0xf]
    %v1062 = vld [vmem:[%s1051 + $0x3c] sm:$0xff]
    %v1063 = vld [vmem:[%s1051 + $0x44] sm:$0xf]
    %v1064 = vld [vmem:[%s1051 + $0x48] sm:$0xff]
    %v1065 = vld [vmem:[%s1051 + $0x50] sm:$0xf]
    %v1066 = vld [vmem:[%s1051 + $0x54] sm:$0xff]
    %v1067 = vld [vmem:[%s1051 + $0x5c] sm:$0xf]
    %v1068 = vld [vmem:[%s1051 + $0x60] sm:$0xff]
    %v1069 = vld [vmem:[%s1051 + $0x68] sm:$0xf]
    %v1070 = vld [vmem:[%s1051 + $0x6c] sm:$0xff]
    %v1071 = vld [vmem:[%s1051 + $0x74] sm:$0xf]
    %v1072 = vld [vmem:[%s1051 + $0x78] sm:$0xff]
    %v1073 = vld [vmem:[%s1051 + $0x80] sm:$0xf]
    %v1074 = vld [vmem:[%s1051 + $0x84] sm:$0xff]
    %v1075 = vld [vmem:[%s1051 + $0x8c] sm:$0xf]
    %v1076 = vld [vmem:[%s1051 + $0x90] sm:$0xff]
    %v1077 = vld [vmem:[%s1051 + $0x98] sm:$0xf]
    %v1078 = vld [vmem:[%s1051 + $0x9c] sm:$0xff]
    %v1079 = vld [vmem:[%s1051 + $0xa4] sm:$0xf]
    %v1080 = vld [vmem:[%s1051 + $0xa8] sm:$0xff]
    %v1081 = vld [vmem:[%s1051 + $0xb0] sm:$0xf]
    %v1082 = vld [vmem:[%s1051 + $0xb4] sm:$0xff]
    %v1083 = vld [vmem:[%s1051 + $0xbc] sm:$0xf]
    %v1084 = vpack.c.bf16 %v1050, %v1049
    %v1117 = vunpack.c.l.b16 %v1052
    %v1118 = vunpack.c.h.b16 %v1052
    %v1119 = vunpack.c.l.b16 %v1053
    %v1120 = vunpack.c.l.b16 %v1054
    %v1121 = vunpack.c.h.b16 %v1054
    %v1122 = vunpack.c.l.b16 %v1055
    %v1123 = vunpack.c.l.b16 %v1056
    %v1124 = vunpack.c.h.b16 %v1056
    %v1125 = vunpack.c.l.b16 %v1057
    %v1126 = vunpack.c.l.b16 %v1058
    %v1127 = vunpack.c.h.b16 %v1058
    %v1128 = vunpack.c.l.b16 %v1059
    %v1129 = vunpack.c.l.b16 %v1060
    %v1130 = vunpack.c.h.b16 %v1060
    %v1131 = vunpack.c.l.b16 %v1061
    %v1132 = vunpack.c.l.b16 %v1062
    %v1133 = vunpack.c.h.b16 %v1062
    %v1134 = vunpack.c.l.b16 %v1063
    %v1135 = vunpack.c.l.b16 %v1064
    %v1136 = vunpack.c.h.b16 %v1064
    %v1137 = vunpack.c.l.b16 %v1065
    %v1138 = vunpack.c.l.b16 %v1066
    %v1139 = vunpack.c.h.b16 %v1066
    %v1140 = vunpack.c.l.b16 %v1067
    %v1141 = vunpack.c.l.b16 %v1068
    %v1142 = vunpack.c.h.b16 %v1068
    %v1143 = vunpack.c.l.b16 %v1069
    %v1144 = vunpack.c.l.b16 %v1070
    %v1145 = vunpack.c.h.b16 %v1070
    %v1146 = vunpack.c.l.b16 %v1071
    %v1147 = vunpack.c.l.b16 %v1072
    %v1148 = vunpack.c.h.b16 %v1072
    %v1149 = vunpack.c.l.b16 %v1073
    %v1150 = vunpack.c.l.b16 %v1074
    %v1151 = vunpack.c.h.b16 %v1074
    %v1152 = vunpack.c.l.b16 %v1075
    %v1153 = vunpack.c.l.b16 %v1076
    %v1154 = vunpack.c.h.b16 %v1076
    %v1155 = vunpack.c.l.b16 %v1077
    %v1156 = vunpack.c.l.b16 %v1078
    %v1157 = vunpack.c.h.b16 %v1078
    %v1158 = vunpack.c.l.b16 %v1079
    %v1159 = vunpack.c.l.b16 %v1080
    %v1160 = vunpack.c.h.b16 %v1080
    %v1161 = vunpack.c.l.b16 %v1081
    %v1162 = vunpack.c.l.b16 %v1082
    %v1163 = vunpack.c.h.b16 %v1082
    %v1164 = vunpack.c.l.b16 %v1083
    %v1165 = vpack.c.b16 %v1120, %v1117
    %v1166 = vpack.c.b16 %v1121, %v1118
    %v1167 = vpack.c.b16 %v1122, %v1119
    %v1168 = vpack.c.b16 %v1126, %v1123
    %v1169 = vpack.c.b16 %v1127, %v1124
    %v1170 = vpack.c.b16 %v1128, %v1125
    %v1171 = vpack.c.b16 %v1132, %v1129
    %v1172 = vpack.c.b16 %v1133, %v1130
    %v1173 = vpack.c.b16 %v1134, %v1131
    %v1174 = vpack.c.b16 %v1138, %v1135
    %v1175 = vpack.c.b16 %v1139, %v1136
    %v1176 = vpack.c.b16 %v1140, %v1137
    %v1177 = vpack.c.b16 %v1144, %v1141
    %v1178 = vpack.c.b16 %v1145, %v1142
    %v1179 = vpack.c.b16 %v1146, %v1143
    %v1180 = vpack.c.b16 %v1150, %v1147
    %v1181 = vpack.c.b16 %v1151, %v1148
    %v1182 = vpack.c.b16 %v1152, %v1149
    %v1183 = vpack.c.b16 %v1156, %v1153
    %v1184 = vpack.c.b16 %v1157, %v1154
    %v1185 = vpack.c.b16 %v1158, %v1155
    %v1186 = vpack.c.b16 %v1162, %v1159
    %v1187 = vpack.c.b16 %v1163, %v1160
    %v1188 = vpack.c.b16 %v1164, %v1161
    %1213 = vmatprep.subr.bf16.mxu0 %v1166
    %1214 = vmatpush1.bf16.msra.mxu0 %v1165
    %1215 = vmatprep.subr.bf16.mxu0 %v1169
    %1216 = vmatpush1.bf16.msra.mxu0 %v1168
    %1217 = vmatprep.subr.bf16.mxu0 %v1172
    %1218 = vmatpush1.bf16.msra.mxu0 %v1171
    %1219 = vmatprep.subr.bf16.mxu0 %v1175
    %1220 = vmatpush1.bf16.msra.mxu0 %v1174
    %1221 = vmatprep.subr.bf16.mxu0 %v1178
    %1222 = vmatpush1.bf16.msra.mxu0 %v1177
    %1223 = vmatprep.subr.bf16.mxu0 %v1181
    %1224 = vmatpush1.bf16.msra.mxu0 %v1180
    %1225 = vmatprep.subr.bf16.mxu0 %v1184
    %1226 = vmatpush1.bf16.msra.mxu0 %v1183
    %1227 = vmatprep.subr.bf16.mxu0 %v1187
    %1228 = vmatpush1.bf16.msra.mxu0 %v1186
    %1229 = vmatprep.subr.bf16.mxu0 0
    %1230 = vmatpush1.bf16.msra.mxu0 0
    %1231 = vmatprep.subr.bf16.mxu0 0
    %1232 = vmatpush1.bf16.msra.mxu0 0
    %1233 = vmatprep.subr.bf16.mxu0 0
    %1234 = vmatpush1.bf16.msra.mxu0 0
    %1235 = vmatprep.subr.bf16.mxu0 0
    %1236 = vmatpush1.bf16.msra.mxu0 0
    %1237 = vmatprep.subr.bf16.mxu0 0
    %1238 = vmatpush1.bf16.msra.mxu0 0
    %1239 = vmatprep.subr.bf16.mxu0 0
    %1240 = vmatpush1.bf16.msra.mxu0 0
    %1241 = vmatprep.subr.bf16.mxu0 0
    %1242 = vmatpush1.bf16.msra.mxu0 0
    %1243 = vmatprep.subr.bf16.mxu0 0
    %1244 = vmatpush1.bf16.msra.mxu0 0
    %1245 = vmatprep.mubr.bf16.mxu0 0
    %1246 = vmatmul.mubr.bf16.gmra.mrb[0].mxu0 %v1084
    %v1247 = vpop.f32.mrb[0].mxu0
    %v1248 = vadd.f32 0.0, %v1247
    %v1249 = vpop.f32.mrb[0].mxu0
    %v1250 = vadd.f32 0.0, %v1249
    %v1251 = vpop.f32.mrb[0].mxu0
    %v1252 = vadd.f32 0.0, %v1251
    %v1253 = vpop.f32.mrb[0].mxu0
    %v1254 = vadd.f32 0.0, %v1253
    %1255 = vdwg.mxu0
    %1256 = vmatprep.subr.bf16.mxu0 0
    %1257 = vmatpush1.bf16.msra.mxu0 %v1167
    %1258 = vmatprep.subr.bf16.mxu0 0
    %1259 = vmatpush1.bf16.msra.mxu0 %v1170
    %1260 = vmatprep.subr.bf16.mxu0 0
    %1261 = vmatpush1.bf16.msra.mxu0 %v1173
    %1262 = vmatprep.subr.bf16.mxu0 0
    %1263 = vmatpush1.bf16.msra.mxu0 %v1176
    %1264 = vmatprep.subr.bf16.mxu0 0
    %1265 = vmatpush1.bf16.msra.mxu0 %v1179
    %1266 = vmatprep.subr.bf16.mxu0 0
    %1267 = vmatpush1.bf16.msra.mxu0 %v1182
    %1268 = vmatprep.subr.bf16.mxu0 0
    %1269 = vmatpush1.bf16.msra.mxu0 %v1185
    %1270 = vmatprep.subr.bf16.mxu0 0
    %1271 = vmatpush1.bf16.msra.mxu0 %v1188
    %1272 = vmatprep.subr.bf16.mxu0 0
    %1273 = vmatpush1.bf16.msra.mxu0 0
    %1274 = vmatprep.subr.bf16.mxu0 0
    %1275 = vmatpush1.bf16.msra.mxu0 0
    %1276 = vmatprep.subr.bf16.mxu0 0
    %1277 = vmatpush1.bf16.msra.mxu0 0
    %1278 = vmatprep.subr.bf16.mxu0 0
    %1279 = vmatpush1.bf16.msra.mxu0 0
    %1280 = vmatprep.subr.bf16.mxu0 0
    %1281 = vmatpush1.bf16.msra.mxu0 0
    %1282 = vmatprep.subr.bf16.mxu0 0
    %1283 = vmatpush1.bf16.msra.mxu0 0
    %1284 = vmatprep.subr.bf16.mxu0 0
    %1285 = vmatpush1.bf16.msra.mxu0 0
    %1286 = vmatprep.subr.bf16.mxu0 0
    %1287 = vmatpush1.bf16.msra.mxu0 0
    %1288 = vmatprep.mubr.bf16.mxu0 0
    %1289 = vmatmul.mubr.bf16.gmra.mrb[0].mxu0 %v1084
    %v1290 = vpop.f32.mrb[0].mxu0
    %v1291 = vadd.f32 0.0, %v1290
    %v1292 = vpop.f32.mrb[0].mxu0
    %v1293 = vpop.f32.mrb[0].mxu0
    %v1294 = vadd.f32 0.0, %v1293
    %v1295 = vpop.f32.mrb[0].mxu0
    %1296 = vdwg.mxu0
    %s1297 = scalar_lea.vmem %s3, 128
    %v1298 = vld [vmem:[%s1297] sm:$0xff]
    %v1299 = vld [vmem:[%s1297 + $0x8] sm:$0xff]
    %v1300 = vld [vmem:[%s1297 + $0x10] sm:$0xff]
    %v1301 = vld [vmem:[%s1297 + $0x18] sm:$0xff]
    %v1302 = vld [vmem:[%s1297 + $0x20] sm:$0xff]
    %v1303 = vld [vmem:[%s1297 + $0x28] sm:$0xff]
    %v1304 = vld [vmem:[%s1297 + $0x30] sm:$0xff]
    %v1305 = vld [vmem:[%s1297 + $0x38] sm:$0xff]
    %v1306 = vld [vmem:[%s1297 + $0x40] sm:$0xff]
    %v1307 = vld [vmem:[%s1297 + $0x48] sm:$0xff]
    %v1308 = vld [vmem:[%s1297 + $0x50] sm:$0xff]
    %v1309 = vld [vmem:[%s1297 + $0x58] sm:$0xff]
    %v1310 = vld [vmem:[%s1297 + $0x60] sm:$0xff]
    %v1311 = vld [vmem:[%s1297 + $0x68] sm:$0xff]
    %v1312 = vld [vmem:[%s1297 + $0x70] sm:$0xff]
    %v1313 = vld [vmem:[%s1297 + $0x78] sm:$0xff]
    %v1314 = vpack.c.bf16 %v34, %v34
    %v1331 = vunpack.c.l.b16 %v1298
    %v1332 = vunpack.c.h.b16 %v1298
    %v1333 = vunpack.c.l.b16 %v1299
    %v1334 = vunpack.c.h.b16 %v1299
    %v1335 = vunpack.c.l.b16 %v1300
    %v1336 = vunpack.c.h.b16 %v1300
    %v1337 = vunpack.c.l.b16 %v1301
    %v1338 = vunpack.c.h.b16 %v1301
    %v1339 = vunpack.c.l.b16 %v1302
    %v1340 = vunpack.c.h.b16 %v1302
    %v1341 = vunpack.c.l.b16 %v1303
    %v1342 = vunpack.c.h.b16 %v1303
    %v1343 = vunpack.c.l.b16 %v1304
    %v1344 = vunpack.c.h.b16 %v1304
    %v1345 = vunpack.c.l.b16 %v1305
    %v1346 = vunpack.c.h.b16 %v1305
    %v1347 = vunpack.c.l.b16 %v1306
    %v1348 = vunpack.c.h.b16 %v1306
    %v1349 = vunpack.c.l.b16 %v1307
    %v1350 = vunpack.c.h.b16 %v1307
    %v1351 = vunpack.c.l.b16 %v1308
    %v1352 = vunpack.c.h.b16 %v1308
    %v1353 = vunpack.c.l.b16 %v1309
    %v1354 = vunpack.c.h.b16 %v1309
    %v1355 = vunpack.c.l.b16 %v1310
    %v1356 = vunpack.c.h.b16 %v1310
    %v1357 = vunpack.c.l.b16 %v1311
    %v1358 = vunpack.c.h.b16 %v1311
    %v1359 = vunpack.c.l.b16 %v1312
    %v1360 = vunpack.c.h.b16 %v1312
    %v1361 = vunpack.c.l.b16 %v1313
    %v1362 = vunpack.c.h.b16 %v1313
    %v1363 = vpack.c.b16 %v1333, %v1331
    %v1364 = vpack.c.b16 %v1334, %v1332
    %v1365 = vpack.c.b16 %v1337, %v1335
    %v1366 = vpack.c.b16 %v1338, %v1336
    %v1367 = vpack.c.b16 %v1341, %v1339
    %v1368 = vpack.c.b16 %v1342, %v1340
    %v1369 = vpack.c.b16 %v1345, %v1343
    %v1370 = vpack.c.b16 %v1346, %v1344
    %v1371 = vpack.c.b16 %v1349, %v1347
    %v1372 = vpack.c.b16 %v1350, %v1348
    %v1373 = vpack.c.b16 %v1353, %v1351
    %v1374 = vpack.c.b16 %v1354, %v1352
    %v1375 = vpack.c.b16 %v1357, %v1355
    %v1376 = vpack.c.b16 %v1358, %v1356
    %v1377 = vpack.c.b16 %v1361, %v1359
    %v1378 = vpack.c.b16 %v1362, %v1360
    %1395 = vmatprep.subr.bf16.mxu0 %v1364
    %1396 = vmatpush1.bf16.msra.mxu0 %v1363
    %1397 = vmatprep.subr.bf16.mxu0 %v1366
    %1398 = vmatpush1.bf16.msra.mxu0 %v1365
    %1399 = vmatprep.subr.bf16.mxu0 %v1368
    %1400 = vmatpush1.bf16.msra.mxu0 %v1367
    %1401 = vmatprep.subr.bf16.mxu0 %v1370
    %1402 = vmatpush1.bf16.msra.mxu0 %v1369
    %1403 = vmatprep.subr.bf16.mxu0 %v1372
    %1404 = vmatpush1.bf16.msra.mxu0 %v1371
    %1405 = vmatprep.subr.bf16.mxu0 %v1374
    %1406 = vmatpush1.bf16.msra.mxu0 %v1373
    %1407 = vmatprep.subr.bf16.mxu0 %v1376
    %1408 = vmatpush1.bf16.msra.mxu0 %v1375
    %1409 = vmatprep.subr.bf16.mxu0 %v1378
    %1410 = vmatpush1.bf16.msra.mxu0 %v1377
    %1411 = vmatprep.subr.bf16.mxu0 0
    %1412 = vmatpush1.bf16.msra.mxu0 0
    %1413 = vmatprep.subr.bf16.mxu0 0
    %1414 = vmatpush1.bf16.msra.mxu0 0
    %1415 = vmatprep.subr.bf16.mxu0 0
    %1416 = vmatpush1.bf16.msra.mxu0 0
    %1417 = vmatprep.subr.bf16.mxu0 0
    %1418 = vmatpush1.bf16.msra.mxu0 0
    %1419 = vmatprep.subr.bf16.mxu0 0
    %1420 = vmatpush1.bf16.msra.mxu0 0
    %1421 = vmatprep.subr.bf16.mxu0 0
    %1422 = vmatpush1.bf16.msra.mxu0 0
    %1423 = vmatprep.subr.bf16.mxu0 0
    %1424 = vmatpush1.bf16.msra.mxu0 0
    %1425 = vmatprep.subr.bf16.mxu0 0
    %1426 = vmatpush1.bf16.msra.mxu0 0
    %1427 = vmatprep.mubr.bf16.mxu0 0
    %1428 = vmatmul.mubr.bf16.gmra.mrb[0].mxu0 %v1314
    %v1429 = vpop.f32.mrb[0].mxu0
    %v1430 = vadd.f32 0.0, %v1429
    %v1431 = vpop.f32.mrb[0].mxu0
    %v1432 = vadd.f32 0.0, %v1431
    %v1433 = vpop.f32.mrb[0].mxu0
    %v1434 = vpop.f32.mrb[0].mxu0
    %1435 = vdwg.mxu0
    %v1436 = vpack.c.bf16 %v1430, %v1430
    %v1437 = vpack.c.bf16 %v1252, %v1248
    %1438 = vmatprep.subr.bf16.mxu0 0
    %1439 = vmatpush1.bf16.xpose.msra.mxu0 %v1437
    %1440 = vmatprep.subr.bf16.mxu0 0
    %1441 = vmatpush1.bf16.xpose.msra.mxu0 0
    %1442 = vmatprep.subr.bf16.mxu0 0
    %1443 = vmatpush1.bf16.xpose.msra.mxu0 0
    %1444 = vmatprep.subr.bf16.mxu0 0
    %1445 = vmatpush1.bf16.xpose.msra.mxu0 0
    %1446 = vmatprep.subr.bf16.mxu0 0
    %1447 = vmatpush1.bf16.xpose.msra.mxu0 0
    %1448 = vmatprep.subr.bf16.mxu0 0
    %1449 = vmatpush1.bf16.xpose.msra.mxu0 0
    %1450 = vmatprep.subr.bf16.mxu0 0
    %1451 = vmatpush1.bf16.xpose.msra.mxu0 0
    %1452 = vmatprep.subr.bf16.mxu0 0
    %1453 = vmatpush1.bf16.xpose.msra.mxu0 0
    %1454 = vmatprep.subr.bf16.mxu0 0
    %1455 = vmatpush1.bf16.xpose.msra.mxu0 0
    %1456 = vmatprep.subr.bf16.mxu0 0
    %1457 = vmatpush1.bf16.xpose.msra.mxu0 0
    %1458 = vmatprep.subr.bf16.mxu0 0
    %1459 = vmatpush1.bf16.xpose.msra.mxu0 0
    %1460 = vmatprep.subr.bf16.mxu0 0
    %1461 = vmatpush1.bf16.xpose.msra.mxu0 0
    %1462 = vmatprep.subr.bf16.mxu0 0
    %1463 = vmatpush1.bf16.xpose.msra.mxu0 0
    %1464 = vmatprep.subr.bf16.mxu0 0
    %1465 = vmatpush1.bf16.xpose.msra.mxu0 0
    %1466 = vmatprep.subr.bf16.mxu0 0
    %1467 = vmatpush1.bf16.xpose.msra.mxu0 0
    %1468 = vmatprep.subr.bf16.mxu0 0
    %1469 = vmatpush1.bf16.xpose.msra.mxu0 0
    %1470 = vmatprep.mubr.bf16.mxu0 0
    %1471 = vmatmul.mubr.bf16.gmra.mrb[0].mxu0 %v1436
    %v1472 = vpop.f32.mrb[0].mxu0
    %v1473 = vadd.f32 0.0, %v1472
    %v1474 = vpop.f32.mrb[0].mxu0
    %v1475 = vpop.f32.mrb[0].mxu0
    %v1476 = vpop.f32.mrb[0].mxu0
    %1477 = vdwg.mxu0
    %v1478 = vmul.f32 %v1473, 0.088388346
    %v1479 = vsel %vm539, %v1478, -inf
    %1480 = vmax.xlane.f32.xlu0 %v1479
    %v1481 = vpop.xlane.xlu0 %1480
    %v1482 = vsub.f32 %v1478, %v1481
    %v1483 = vmul.f32 %v1482, 1.442695
    %v1484 = vpow.pop %v1483
    %v1485 = vsel %vm539, %v1484, 0.0
    %1486 = vadd.xlane.f32.xlu0 %v1485
    %v1487 = vpop.xlane.xlu0 %1486
    %v1488 = vrcp.pop %v1487
    %v1489 = vmul.f32 %v1484, %v1488
    %v1490 = vpack.c.bf16 %v1489, %v1489
    %v1491 = vpack.c.bf16 %v1254, %v1250
    %v1493 = vsel %vm539, %v1490, 0
    %1495 = vmatprep.subr.bf16.mxu0 0
    %1496 = vmatpush1.bf16.msra.mxu0 %v1491
    %1497 = vmatprep.subr.bf16.mxu0 0
    %1498 = vmatpush1.bf16.msra.mxu0 0
    %1499 = vmatprep.subr.bf16.mxu0 0
    %1500 = vmatpush1.bf16.msra.mxu0 0
    %1501 = vmatprep.subr.bf16.mxu0 0
    %1502 = vmatpush1.bf16.msra.mxu0 0
    %1503 = vmatprep.subr.bf16.mxu0 0
    %1504 = vmatpush1.bf16.msra.mxu0 0
    %1505 = vmatprep.subr.bf16.mxu0 0
    %1506 = vmatpush1.bf16.msra.mxu0 0
    %1507 = vmatprep.subr.bf16.mxu0 0
    %1508 = vmatpush1.bf16.msra.mxu0 0
    %1509 = vmatprep.subr.bf16.mxu0 0
    %1510 = vmatpush1.bf16.msra.mxu0 0
    %1511 = vmatprep.subr.bf16.mxu0 0
    %1512 = vmatpush1.bf16.msra.mxu0 0
    %1513 = vmatprep.subr.bf16.mxu0 0
    %1514 = vmatpush1.bf16.msra.mxu0 0
    %1515 = vmatprep.subr.bf16.mxu0 0
    %1516 = vmatpush1.bf16.msra.mxu0 0
    %1517 = vmatprep.subr.bf16.mxu0 0
    %1518 = vmatpush1.bf16.msra.mxu0 0
    %1519 = vmatprep.subr.bf16.mxu0 0
    %1520 = vmatpush1.bf16.msra.mxu0 0
    %1521 = vmatprep.subr.bf16.mxu0 0
    %1522 = vmatpush1.bf16.msra.mxu0 0
    %1523 = vmatprep.subr.bf16.mxu0 0
    %1524 = vmatpush1.bf16.msra.mxu0 0
    %1525 = vmatprep.subr.bf16.mxu0 0
    %1526 = vmatpush1.bf16.msra.mxu0 0
    %1527 = vmatprep.mubr.bf16.mxu0 0
    %1528 = vmatmul.mubr.bf16.gmra.mrb[0].mxu0 %v1493
    %v1529 = vpop.f32.mrb[0].mxu0
    %v1530 = vadd.f32 0.0, %v1529
    %v1531 = vpop.f32.mrb[0].mxu0
    %v1532 = vpop.f32.mrb[0].mxu0
    %v1533 = vpop.f32.mrb[0].mxu0
    %1534 = vdwg.mxu0
    %s1535 = scalar_lea.vmem %s3, 256
    %v1536 = vld [vmem:[%s1535] sm:$0xff]
    %v1537 = vld [vmem:[%s1535 + $0x8] sm:$0xff]
    %v1538 = vld [vmem:[%s1535 + $0x10] sm:$0xff]
    %v1539 = vld [vmem:[%s1535 + $0x18] sm:$0xff]
    %v1540 = vld [vmem:[%s1535 + $0x20] sm:$0xff]
    %v1541 = vld [vmem:[%s1535 + $0x28] sm:$0xff]
    %v1542 = vld [vmem:[%s1535 + $0x30] sm:$0xff]
    %v1543 = vld [vmem:[%s1535 + $0x38] sm:$0xff]
    %v1544 = vld [vmem:[%s1535 + $0x40] sm:$0xff]
    %v1545 = vld [vmem:[%s1535 + $0x48] sm:$0xff]
    %v1546 = vld [vmem:[%s1535 + $0x50] sm:$0xff]
    %v1547 = vld [vmem:[%s1535 + $0x58] sm:$0xff]
    %v1548 = vld [vmem:[%s1535 + $0x60] sm:$0xff]
    %v1549 = vld [vmem:[%s1535 + $0x68] sm:$0xff]
    %v1550 = vld [vmem:[%s1535 + $0x70] sm:$0xff]
    %v1551 = vld [vmem:[%s1535 + $0x78] sm:$0xff]
    %v1552 = vpack.c.bf16 %v1530, %v1530
    %v1569 = vunpack.c.l.b16 %v1536
    %v1570 = vunpack.c.h.b16 %v1536
    %v1571 = vunpack.c.l.b16 %v1537
    %v1572 = vunpack.c.h.b16 %v1537
    %v1573 = vunpack.c.l.b16 %v1538
    %v1574 = vunpack.c.h.b16 %v1538
    %v1575 = vunpack.c.l.b16 %v1539
    %v1576 = vunpack.c.h.b16 %v1539
    %v1577 = vunpack.c.l.b16 %v1540
    %v1578 = vunpack.c.h.b16 %v1540
    %v1579 = vunpack.c.l.b16 %v1541
    %v1580 = vunpack.c.h.b16 %v1541
    %v1581 = vunpack.c.l.b16 %v1542
    %v1582 = vunpack.c.h.b16 %v1542
    %v1583 = vunpack.c.l.b16 %v1543
    %v1584 = vunpack.c.h.b16 %v1543
    %v1585 = vunpack.c.l.b16 %v1544
    %v1586 = vunpack.c.h.b16 %v1544
    %v1587 = vunpack.c.l.b16 %v1545
    %v1588 = vunpack.c.h.b16 %v1545
    %v1589 = vunpack.c.l.b16 %v1546
    %v1590 = vunpack.c.h.b16 %v1546
    %v1591 = vunpack.c.l.b16 %v1547
    %v1592 = vunpack.c.h.b16 %v1547
    %v1593 = vunpack.c.l.b16 %v1548
    %v1594 = vunpack.c.h.b16 %v1548
    %v1595 = vunpack.c.l.b16 %v1549
    %v1596 = vunpack.c.h.b16 %v1549
    %v1597 = vunpack.c.l.b16 %v1550
    %v1598 = vunpack.c.h.b16 %v1550
    %v1599 = vunpack.c.l.b16 %v1551
    %v1600 = vunpack.c.h.b16 %v1551
    %v1601 = vpack.c.b16 %v1571, %v1569
    %v1602 = vpack.c.b16 %v1572, %v1570
    %v1603 = vpack.c.b16 %v1575, %v1573
    %v1604 = vpack.c.b16 %v1576, %v1574
    %v1605 = vpack.c.b16 %v1579, %v1577
    %v1606 = vpack.c.b16 %v1580, %v1578
    %v1607 = vpack.c.b16 %v1583, %v1581
    %v1608 = vpack.c.b16 %v1584, %v1582
    %v1609 = vpack.c.b16 %v1587, %v1585
    %v1610 = vpack.c.b16 %v1588, %v1586
    %v1611 = vpack.c.b16 %v1591, %v1589
    %v1612 = vpack.c.b16 %v1592, %v1590
    %v1613 = vpack.c.b16 %v1595, %v1593
    %v1614 = vpack.c.b16 %v1596, %v1594
    %v1615 = vpack.c.b16 %v1599, %v1597
    %v1616 = vpack.c.b16 %v1600, %v1598
    %1633 = vmatprep.subr.bf16.mxu0 %v1602
    %1634 = vmatpush1.bf16.msra.mxu0 %v1601
    %1635 = vmatprep.subr.bf16.mxu0 %v1604
    %1636 = vmatpush1.bf16.msra.mxu0 %v1603
    %1637 = vmatprep.subr.bf16.mxu0 %v1606
    %1638 = vmatpush1.bf16.msra.mxu0 %v1605
    %1639 = vmatprep.subr.bf16.mxu0 %v1608
    %1640 = vmatpush1.bf16.msra.mxu0 %v1607
    %1641 = vmatprep.subr.bf16.mxu0 %v1610
    %1642 = vmatpush1.bf16.msra.mxu0 %v1609
    %1643 = vmatprep.subr.bf16.mxu0 %v1612
    %1644 = vmatpush1.bf16.msra.mxu0 %v1611
    %1645 = vmatprep.subr.bf16.mxu0 %v1614
    %1646 = vmatpush1.bf16.msra.mxu0 %v1613
    %1647 = vmatprep.subr.bf16.mxu0 %v1616
    %1648 = vmatpush1.bf16.msra.mxu0 %v1615
    %1649 = vmatprep.subr.bf16.mxu0 0
    %1650 = vmatpush1.bf16.msra.mxu0 0
    %1651 = vmatprep.subr.bf16.mxu0 0
    %1652 = vmatpush1.bf16.msra.mxu0 0
    %1653 = vmatprep.subr.bf16.mxu0 0
    %1654 = vmatpush1.bf16.msra.mxu0 0
    %1655 = vmatprep.subr.bf16.mxu0 0
    %1656 = vmatpush1.bf16.msra.mxu0 0
    %1657 = vmatprep.subr.bf16.mxu0 0
    %1658 = vmatpush1.bf16.msra.mxu0 0
    %1659 = vmatprep.subr.bf16.mxu0 0
    %1660 = vmatpush1.bf16.msra.mxu0 0
    %1661 = vmatprep.subr.bf16.mxu0 0
    %1662 = vmatpush1.bf16.msra.mxu0 0
    %1663 = vmatprep.subr.bf16.mxu0 0
    %1664 = vmatpush1.bf16.msra.mxu0 0
    %1665 = vmatprep.mubr.bf16.mxu0 0
    %1666 = vmatmul.mubr.bf16.gmra.mrb[0].mxu0 %v1552
    %v1667 = vpop.f32.mrb[0].mxu0
    %v1668 = vadd.f32 0.0, %v1667
    %v1669 = vpop.f32.mrb[0].mxu0
    %v1670 = vadd.f32 0.0, %v1669
    %v1671 = vpop.f32.mrb[0].mxu0
    %v1672 = vpop.f32.mrb[0].mxu0
    %1673 = vdwg.mxu0
    %v1674 = vadd.f32 %v34, %v1668
    %v1675 = vadd.f32 %v1432, %v1670
    %v1676 = vmul.f32 %v1291, 0.5
    %v1677 = vmul.f32 %v1294, 0.5
    %v1678 = vmul.f32 %v1291, 0.044715
    %v1679 = vmul.f32 %v1294, 0.044715
    %v1680 = vmul.f32 %v1678, %v1291
    %v1681 = vmul.f32 %v1679, %v1294
    %v1682 = vmul.f32 %v1680, %v1291
    %v1683 = vmul.f32 %v1681, %v1294
    %v1684 = vadd.f32 %v1291, %v1682
    %v1685 = vadd.f32 %v1294, %v1683
    %v1686 = vmul.f32 %v1684, 0.7978846
    %v1687 = vmul.f32 %v1685, 0.7978846
    %v1688 = vtanh.pop %v1686
    %v1689 = vtanh.pop %v1687
    %v1690 = vadd.f32 %v1688, 1.0
    %v1691 = vadd.f32 %v1689, 1.0
    %v1692 = vmul.f32 %v1676, %v1690
    %v1693 = vmul.f32 %v1677, %v1691
    %v1694 = vpack.c.bf16 %v1693, %v1692
    %v1711 = vunpack.c.l.b16 %v70
    %v1712 = vunpack.c.l.b16 %v71
    %v1713 = vunpack.c.l.b16 %v72
    %v1714 = vunpack.c.l.b16 %v73
    %v1715 = vunpack.c.l.b16 %v74
    %v1716 = vunpack.c.l.b16 %v75
    %v1717 = vunpack.c.l.b16 %v76
    %v1718 = vunpack.c.l.b16 %v77
    %v1719 = vunpack.c.l.b16 %v78
    %v1720 = vunpack.c.l.b16 %v79
    %v1721 = vunpack.c.l.b16 %v80
    %v1722 = vunpack.c.l.b16 %v81
    %v1723 = vunpack.c.l.b16 %v82
    %v1724 = vunpack.c.l.b16 %v83
    %v1725 = vunpack.c.l.b16 %v84
    %v1726 = vunpack.c.l.b16 %v85
    %v1727 = vpack.c.b16 %v1712, %v1711
    %v1728 = vpack.c.b16 %v1714, %v1713
    %v1729 = vpack.c.b16 %v1716, %v1715
    %v1730 = vpack.c.b16 %v1718, %v1717
    %v1731 = vpack.c.b16 %v1720, %v1719
    %v1732 = vpack.c.b16 %v1722, %v1721
    %v1733 = vpack.c.b16 %v1724, %v1723
    %v1734 = vpack.c.b16 %v1726, %v1725
    %1743 = vmatprep.subr.bf16.mxu0 0
    %1744 = vmatpush1.bf16.msra.mxu0 %v1727
    %1745 = vmatprep.subr.bf16.mxu0 0
    %1746 = vmatpush1.bf16.msra.mxu0 %v1728
    %1747 = vmatprep.subr.bf16.mxu0 0
    %1748 = vmatpush1.bf16.msra.mxu0 %v1729
    %1749 = vmatprep.subr.bf16.mxu0 0
    %1750 = vmatpush1.bf16.msra.mxu0 %v1730
    %1751 = vmatprep.subr.bf16.mxu0 0
    %1752 = vmatpush1.bf16.msra.mxu0 %v1731
    %1753 = vmatprep.subr.bf16.mxu0 0
    %1754 = vmatpush1.bf16.msra.mxu0 %v1732
    %1755 = vmatprep.subr.bf16.mxu0 0
    %1756 = vmatpush1.bf16.msra.mxu0 %v1733
    %1757 = vmatprep.subr.bf16.mxu0 0
    %1758 = vmatpush1.bf16.msra.mxu0 %v1734
    %1759 = vmatprep.subr.bf16.mxu0 0
    %1760 = vmatpush1.bf16.msra.mxu0 0
    %1761 = vmatprep.subr.bf16.mxu0 0
    %1762 = vmatpush1.bf16.msra.mxu0 0
    %1763 = vmatprep.subr.bf16.mxu0 0
    %1764 = vmatpush1.bf16.msra.mxu0 0
    %1765 = vmatprep.subr.bf16.mxu0 0
    %1766 = vmatpush1.bf16.msra.mxu0 0
    %1767 = vmatprep.subr.bf16.mxu0 0
    %1768 = vmatpush1.bf16.msra.mxu0 0
    %1769 = vmatprep.subr.bf16.mxu0 0
    %1770 = vmatpush1.bf16.msra.mxu0 0
    %1771 = vmatprep.subr.bf16.mxu0 0
    %1772 = vmatpush1.bf16.msra.mxu0 0
    %1773 = vmatprep.subr.bf16.mxu0 0
    %1774 = vmatpush1.bf16.msra.mxu0 0
    %1775 = vmatprep.mubr.bf16.mxu0 0
    %1776 = vmatmul.mubr.bf16.gmra.mrb[0].mxu0 %v1694
    %v1777 = vpop.f32.mrb[0].mxu0
    %v1778 = vadd.f32 0.0, %v1777
    %v1779 = vpop.f32.mrb[0].mxu0
    %v1780 = vpop.f32.mrb[0].mxu0
    %v1781 = vadd.f32 0.0, %v1780
    %v1782 = vpop.f32.mrb[0].mxu0
    %1783 = vdwg.mxu0
    %v1784 = vpack.c.bf16 %v1675, %v1675
    %v1785 = vpack.c.bf16 %v1781, %v1778
    %1786 = vmatprep.subr.bf16.mxu0 0
    %1787 = vmatpush1.bf16.xpose.msra.mxu0 %v1785
    %1788 = vmatprep.subr.bf16.mxu0 0
    %1789 = vmatpush1.bf16.xpose.msra.mxu0 0
    %1790 = vmatprep.subr.bf16.mxu0 0
    %1791 = vmatpush1.bf16.xpose.msra.mxu0 0
    %1792 = vmatprep.subr.bf16.mxu0 0
    %1793 = vmatpush1.bf16.xpose.msra.mxu0 0
    %1794 = vmatprep.subr.bf16.mxu0 0
    %1795 = vmatpush1.bf16.xpose.msra.mxu0 0
    %1796 = vmatprep.subr.bf16.mxu0 0
    %1797 = vmatpush1.bf16.xpose.msra.mxu0 0
    %1798 = vmatprep.subr.bf16.mxu0 0
    %1799 = vmatpush1.bf16.xpose.msra.mxu0 0
    %1800 = vmatprep.subr.bf16.mxu0 0
    %1801 = vmatpush1.bf16.xpose.msra.mxu0 0
    %1802 = vmatprep.subr.bf16.mxu0 0
    %1803 = vmatpush1.bf16.xpose.msra.mxu0 0
    %1804 = vmatprep.subr.bf16.mxu0 0
    %1805 = vmatpush1.bf16.xpose.msra.mxu0 0
    %1806 = vmatprep.subr.bf16.mxu0 0
    %1807 = vmatpush1.bf16.xpose.msra.mxu0 0
    %1808 = vmatprep.subr.bf16.mxu0 0
    %1809 = vmatpush1.bf16.xpose.msra.mxu0 0
    %1810 = vmatprep.subr.bf16.mxu0 0
    %1811 = vmatpush1.bf16.xpose.msra.mxu0 0
    %1812 = vmatprep.subr.bf16.mxu0 0
    %1813 = vmatpush1.bf16.xpose.msra.mxu0 0
    %1814 = vmatprep.subr.bf16.mxu0 0
    %1815 = vmatpush1.bf16.xpose.msra.mxu0 0
    %1816 = vmatprep.subr.bf16.mxu0 0
    %1817 = vmatpush1.bf16.xpose.msra.mxu0 0
    %1818 = vmatprep.mubr.bf16.mxu0 0
    %1819 = vmatmul.mubr.bf16.gmra.mrb[0].mxu0 %v1784
    %v1820 = vpop.f32.mrb[0].mxu0
    %v1821 = vadd.f32 0.0, %v1820
    %v1822 = vpop.f32.mrb[0].mxu0
    %v1823 = vpop.f32.mrb[0].mxu0
    %v1824 = vpop.f32.mrb[0].mxu0
    %1825 = vdwg.mxu0
    %vm1826 = vcmask 122880
    %1827 = vst.msk [vmem:[%s4] sm:$0x1] %vm1826, %v1821
    %v1829 = vrot.slane %v37, 4
    %v1831 = vmul.f32 %v1674, %v1829
    %vm1832 = vcmask 1041409
    %v1833 = vsel %vm1832, %v1831, 0.0
    %1834 = vadd.xlane.f32.xlu0 %v1833
    %v1835 = vpop.xlane.xlu0 %1834
    %vm1836 = vcmask 1025
    %1837 = vst.msk [vmem:[%s4] sm:$0x2] %vm1836, %v1835
    // Predicated region
    $region22: #{sam_neuro_2d_forward.1} parent=1 // pred_check
      _
    $region23: #{sam_neuro_2d_forward.1} parent=1 // pred_check_branch
      %1839 = sbr.rel (0) target = $region25
    $region24: #{sam_neuro_2d_forward.1} parent=1 // pred_region
      _
    $region25: #{sam_neuro_2d_forward.1} parent=1 // pred_fallthru
      _
    // Predicated region
    $region26: #{sam_neuro_2d_forward.1} parent=1 // pred_check
      _
    $region27: #{sam_neuro_2d_forward.1} parent=1 // pred_check_branch
      %1841 = sbr.rel (0) target = $region29
    $region28: #{sam_neuro_2d_forward.1} parent=1 // pred_region
      _
    $region29: #{sam_neuro_2d_forward.1} parent=1 // pred_fallthru
      _
    %1842 = vsyncpa [#allocation3], 1

</llo_original>
